<compile_context>
chip_gen: v6e
topology: v6e:2x2x1
jax: 0.10.0
libtpu: 0.0.40
codegen_flags: <defaults>
</compile_context>

<pallas_src>
import jax
import jax.numpy as jnp
from jax.experimental import pallas as pl
from jax.experimental.pallas import tpu as pltpu


# ---------------------------------------------------------------------------
# stride-0 (sublane-broadcast) load support probe, with safe fallback
# ---------------------------------------------------------------------------
_STRIDE0_BCAST = None


def _probe_stride0_broadcast():
    """Check that `ref[pl.ds(row, n, stride=0), :]` broadcasts a row on this TPU."""
    try:
        pl.ds(0, 8, stride=0)          # constructor-level validation
    except Exception:
        return False
    try:
        def k(x_ref, o_ref):
            o_ref[...] = x_ref[pl.ds(1, 16, stride=0), :].astype(jnp.float32)

        x = jnp.arange(16 * 128, dtype=jnp.float32).reshape(16, 128)
        x_bf = x.astype(jnp.bfloat16)
        out = pl.pallas_call(
            k, out_shape=jax.ShapeDtypeStruct((16, 128), jnp.float32))(x_bf)
        expect = jnp.broadcast_to(x_bf[1:2].astype(jnp.float32), (16, 128))
        return bool(jnp.allclose(jax.block_until_ready(out), expect))
    except Exception:
        return False


def _stride0_bcast_ok():
    global _STRIDE0_BCAST
    if _STRIDE0_BCAST is None:
        _STRIDE0_BCAST = _probe_stride0_broadcast()
    return _STRIDE0_BCAST


# ---------------------------------------------------------------------------
# kernel
# ---------------------------------------------------------------------------
def _build_kernel(batch, tile, use_stride0):
    """One node-tile of the fused forward pass.

    x_ref  : [6*B, T]  bf16 activations; row c*B + b holds input channel c of batch b
    p_ref  : [48, T]   bf16 packed params:
                        rows  0..35 : per-node Linear weight w[c, d] at row c*6 + d
                        rows 36..41 : per-node Linear bias   b[d]
                        rows 42..47 : fc_final weight with BN1 scale folded, wf[d]
    o_ref  : [1, B, 128]  per-core pre-sigmoid partial sum (lane-dense, broadcast)
    acc_ref: [B, T]    f32 running per-lane partial sums of the final projection
    """

    def kernel(x_ref, p_ref, o_ref, acc_ref):
        t = pl.program_id(1)

        @pl.when(t == 0)
        def _init():
            acc_ref[...] = jnp.zeros_like(acc_ref)

        def prow(row):
            # One packed-param row broadcast over the batch sublanes, as f32.
            if use_stride0:
                r = p_ref[pl.ds(row, batch, stride=0), :]          # vld-slot broadcast
            else:
                r = jnp.broadcast_to(p_ref[pl.ds(row, 1), :], (batch, tile))
            return r.astype(jnp.float32)

        # per-node Linear(6,6) + relu + (BN1-folded) fc_final contribution as
        # unrolled VPU multiply-adds — no MXU, no dense [F,F] weight.
        contrib = None
        for d in range(6):
            xo_d = prow(36 + d)                                    # bias b[d]
            for c in range(6):
                xc = x_ref[pl.ds(c * batch, batch), :].astype(jnp.float32)
                xo_d = xo_d + prow(c * 6 + d) * xc                 # w[c, d] * x[c]
            h_d = jnp.maximum(xo_d, 0.0)                           # relu
            cd = h_d * prow(42 + d)                                # BN1 scale folded
            contrib = cd if contrib is None else contrib + cd

        acc_ref[...] += contrib                                    # [B, T]

        @pl.when(t == pl.num_programs(1) - 1)
        def _finalize():
            # pre-sigmoid, pre-bias partial sum for this core's half of the nodes
            z = jnp.sum(acc_ref[...], axis=-1, keepdims=True)      # [B, 1]
            o_ref[...] = jnp.broadcast_to(z, o_ref.shape)

    return kernel


# ---------------------------------------------------------------------------
# wrapper
# ---------------------------------------------------------------------------
def mynet_forward(data, w_nodes, b_nodes, scale1, shift1, wf_eff, bf_eff,
                  *, tile_n=8192):
    """data: [B, 6*N].  w_nodes: [N,6,6] (out,in).  b_nodes: [N,6].
    scale1/shift1: [F] folded BN1.  wf_eff: [F,1], bf_eff: [1,1] (BN_final folded)."""
    B, F = data.shape
    N = F // 6
    assert F == 6 * N

    # --- host/XLA-side relayout (node index -> lane axis) --------------------
    x_cbn = data.reshape(B, N, 6).transpose(2, 0, 1)               # [6(c), B, N]
    x_pack = x_cbn.reshape(6 * B, N)                               # row = c*B + b

    w_rows = jnp.transpose(w_nodes, (2, 1, 0)).reshape(36, N)      # row = c*6 + d
    b_rows = b_nodes.T                                             # [6(d), N]
    wf_rows = (scale1 * wf_eff[:, 0]).reshape(N, 6).T              # [6(d), N], BN1 folded
    p_pack = jnp.concatenate([w_rows, b_rows, wf_rows], axis=0)    # [48, N]

    # BN1 shift + fc bias + BN_final fold -> a single scalar added in the epilogue.
    bias_fold = shift1 @ wf_eff[:, 0] + bf_eff[0, 0]

    # --- node-axis padding: 2 halves (one per TensorCore on v7x) x tpc tiles ---
    lane = 128
    max_tile = max(lane, (tile_n // lane) * lane)
    per_core = pl.cdiv(pl.cdiv(N, 2), lane) * lane                 # lane-aligned half
    tpc = pl.cdiv(per_core, max_tile)                              # tiles per core
    tile = pl.cdiv(per_core, tpc * lane) * lane                    # actual tile <= max_tile
    per_core = tpc * tile
    n_pad = 2 * per_core
    pad = n_pad - N
    if pad:
        x_pack = jnp.pad(x_pack, ((0, 0), (0, pad)))
        p_pack = jnp.pad(p_pack, ((0, 0), (0, pad)))               # zero wf kills padded nodes

    # bf16 HBM storage; arithmetic stays f32 inside the kernel.
    x_pack = x_pack.astype(jnp.bfloat16)
    p_pack = p_pack.astype(jnp.bfloat16)

    kernel = _build_kernel(B, tile, _stride0_bcast_ok())

    partial = pl.pallas_call(
        kernel,
        out_shape=jax.ShapeDtypeStruct((2, B, 128), jnp.float32),
        grid=(2, tpc),
        in_specs=[
            pl.BlockSpec((6 * B, tile), lambda c, t: (0, c * tpc + t)),   # x slab
            pl.BlockSpec((48, tile), lambda c, t: (0, c * tpc + t)),      # packed params
        ],
        out_specs=pl.BlockSpec((1, B, 128), lambda c, t: (c, 0, 0)),      # per-core block
        scratch_shapes=[pltpu.VMEM((B, tile), jnp.float32)],              # fc accumulator
        compiler_params=pltpu.CompilerParams(
            # core-split axis is independent ("parallel", sharded on v7x's 2 TCs);
            # the node-tile axis carries the fc_final reduction ("arbitrary").
            dimension_semantics=("parallel", "arbitrary"),
            vmem_limit_bytes=32 * 1024 * 1024),                           # safe on v5e/v6e/v7x
    )(x_pack, p_pack)

    # 2-way core reduction + folded bias + sigmoid (tiny epilogue, done in XLA).
    z = partial[0, :, :1] + partial[1, :, :1] + bias_fold
    return jax.nn.sigmoid(z)


# ---------------------------------------------------------------------------
# parameter construction + pure-JAX reference
# ---------------------------------------------------------------------------
def build_params(key, num_nodes):
    F = 6 * num_nodes
    ks = jax.random.split(key, 8)
    eps = 1e-5

    # per-node Linear(6, 6): weight [N, 6, 6] (out, in), bias [N, 6]
    w_nodes = jax.random.normal(ks[0], (num_nodes, 6, 6), jnp.float32) * 0.2
    b_nodes = jax.random.normal(ks[1], (num_nodes, 6), jnp.float32) * 0.1

    # BatchNorm1d(6*N), eval mode -> scale/shift
    gamma1 = 1.0 + 0.05 * jax.random.normal(ks[2], (F,), jnp.float32)
    beta1 = 0.05 * jax.random.normal(ks[3], (F,), jnp.float32)
    rmean1 = 0.1 * jax.random.normal(ks[4], (F,), jnp.float32)
    rvar1 = 1.0 + 0.1 * jnp.abs(jax.random.normal(ks[5], (F,), jnp.float32))
    scale1 = gamma1 / jnp.sqrt(rvar1 + eps)
    shift1 = beta1 - rmean1 * scale1

    # fc_final: Linear(6*N, 1)
    wf = jax.random.normal(ks[6], (F, 1), jnp.float32) * 0.05
    bf = jnp.full((1, 1), 0.03, jnp.float32)

    # BatchNorm1d(1), eval mode, folded into fc_final
    gamma_f, beta_f, rmean_f, rvar_f = 1.1, -0.2, 0.05, 1.3
    scale_f = gamma_f / jnp.sqrt(rvar_f + eps)
    shift_f = beta_f - rmean_f * scale_f
    wf_eff = wf * scale_f
    bf_eff = bf * scale_f + shift_f

    return w_nodes, b_nodes, scale1, shift1, wf_eff, bf_eff


def reference_forward(data, w_nodes, b_nodes, scale1, shift1, wf_eff, bf_eff):
    """Pure-JAX f32 reference in the original (unfused) op order."""
    B, F = data.shape
    N = F // 6
    xr = data.reshape(B, N, 6)
    xo = jnp.einsum('bnc,ndc->bnd', xr, w_nodes) + b_nodes[None, :, :]   # per-node Linear
    xo = xo.reshape(B, F)                                                 # hstack order
    h = jnp.maximum(xo, 0.0) * scale1[None, :] + shift1[None, :]          # relu + BN1
    z = h @ wf_eff + bf_eff                                               # fc_final + BN_final
    return jax.nn.sigmoid(z)


if __name__ == "__main__":
    # Small shapes consistent with the module: NUM_NODES nodes, 6 features each.
    B = 16
    NUM_NODES = 300          # module uses 17185; kept small for the demo
    F = 6 * NUM_NODES        # 1800

    key = jax.random.PRNGKey(0)
    k_data, k_params = jax.random.split(key)

    data = jax.random.normal(k_data, (B, F), jnp.float32)
    params = build_params(k_params, NUM_NODES)

    # tile_n=128 at demo size -> 2 node tiles per core-half (exercises padding,
    # the dual-block output and per-core accumulation).  At the real N=17185 the
    # default tile_n=8192 resolves to 2 tiles of 4352 lanes per core (~1% padding).
    out = jax.block_until_ready(mynet_forward(data, *params, tile_n=128))

    ref = reference_forward(data, *params)
    assert out.shape == (B, 1)
    # bf16 HBM storage of x / params gives ~1e-3-level drift vs. the f32 reference.
    assert jnp.allclose(out, ref, atol=5e-3, rtol=2e-2), "mismatch vs JAX reference"

    print("KERNEL_OK")
</pallas_src>

<mosaic_0001>
module attributes {stable_mosaic.version = 11 : i64} {
  func.func @k(%arg0: memref<16x128xbf16, #tpu.memory_space<vmem>>, %arg1: memref<16x128xf32, #tpu.memory_space<vmem>>) attributes {dimension_semantics = [], scalar_prefetch = 0 : i64, scratch_operands = 0 : i64, tpu.core_type = #tpu.core_type<tc>} {
    %c1 = arith.constant 1 : index
    %c0 = arith.constant 0 : index
    %0 = tpu.strided_load %arg0[%c1, %c0] {strides = array<i32: 0, 1>} : memref<16x128xbf16, #tpu.memory_space<vmem>>, vector<16x128xbf16>
    %1 = arith.extf %0 : vector<16x128xbf16> to vector<16x128xf32>
    %c0_0 = arith.constant 0 : index
    %c0_1 = arith.constant 0 : index
    %2 = vector.load %arg1[%c0_0, %c0_1] : memref<16x128xf32, #tpu.memory_space<vmem>>, vector<16x128xf32>
    tpu.vector_store %arg1[%c0_0, %c0_1], %1 {strides = array<i32>} : memref<16x128xf32, #tpu.memory_space<vmem>>, vector<16x128xf32>,
    return
  }
}

module attributes {stable_mosaic.version = 11 : i64} {
  func.func @kernel(%arg0: i32, %arg1: i32, %arg2: memref<96x128xbf16, #tpu.memory_space<vmem>>, %arg3: memref<48x128xbf16, #tpu.memory_space<vmem>>, %arg4: memref<1x16x128xf32, #tpu.memory_space<vmem>>, %arg5: memref<16x128xf32, #tpu.memory_space<vmem>>) attributes {dimension_semantics = [#tpu.dimension_semantics<parallel>, #tpu.dimension_semantics<arbitrary>], iteration_bounds = array<i64: 2, 2>, scalar_prefetch = 0 : i64, scratch_operands = 1 : i64, tpu.core_type = #tpu.core_type<tc>, window_params = [{transform_indices = @transform_0, window_bounds = array<i64: 96, 128>}, {transform_indices = @transform_1, window_bounds = array<i64: 48, 128>}, {transform_indices = @transform_2, window_bounds = array<i64: 1, 16, 128>}]} {
    %c0_i32 = arith.constant 0 : i32
    %0 = arith.cmpi eq, %arg1, %c0_i32 : i32
    %1 = arith.extui %0 : i1 to i32
    %c0_i32_0 = arith.constant 0 : i32
    %2 = arith.cmpi ne, %1, %c0_i32_0 : i32
    scf.if %2 {
      %cst_128 = arith.constant 0.000000e+00 : f32
      %368 = vector.broadcast %cst_128 : f32 to vector<16x128xf32>
      %c0_129 = arith.constant 0 : index
      %c0_130 = arith.constant 0 : index
      %369 = vector.load %arg5[%c0_129, %c0_130] : memref<16x128xf32, #tpu.memory_space<vmem>>, vector<16x128xf32>
      tpu.vector_store %arg5[%c0_129, %c0_130], %368 {strides = array<i32>} : memref<16x128xf32, #tpu.memory_space<vmem>>, vector<16x128xf32>,
    } else {
    }
    %c36 = arith.constant 36 : index
    %c0 = arith.constant 0 : index
    %3 = vector.load %arg3[%c36, %c0] : memref<48x128xbf16, #tpu.memory_space<vmem>>, vector<1x128xbf16>
    %4 = vector.shape_cast %3 : vector<1x128xbf16> to vector<1x128xbf16>
    %5 = vector.broadcast %4 : vector<1x128xbf16> to vector<16x128xbf16>
    %6 = arith.extf %5 : vector<16x128xbf16> to vector<16x128xf32>
    %c0_1 = arith.constant 0 : index
    %c0_2 = arith.constant 0 : index
    %7 = vector.load %arg2[%c0_1, %c0_2] : memref<96x128xbf16, #tpu.memory_space<vmem>>, vector<16x128xbf16>
    %8 = arith.extf %7 : vector<16x128xbf16> to vector<16x128xf32>
    %c0_3 = arith.constant 0 : index
    %c0_4 = arith.constant 0 : index
    %9 = vector.load %arg3[%c0_3, %c0_4] : memref<48x128xbf16, #tpu.memory_space<vmem>>, vector<1x128xbf16>
    %10 = vector.shape_cast %9 : vector<1x128xbf16> to vector<1x128xbf16>
    %11 = vector.broadcast %10 : vector<1x128xbf16> to vector<16x128xbf16>
    %12 = arith.extf %11 : vector<16x128xbf16> to vector<16x128xf32>
    %13 = arith.mulf %12, %8 : vector<16x128xf32>
    %14 = arith.addf %6, %13 : vector<16x128xf32>
    %c16 = arith.constant 16 : index
    %c0_5 = arith.constant 0 : index
    %15 = vector.load %arg2[%c16, %c0_5] : memref<96x128xbf16, #tpu.memory_space<vmem>>, vector<16x128xbf16>
    %16 = arith.extf %15 : vector<16x128xbf16> to vector<16x128xf32>
    %c6 = arith.constant 6 : index
    %c0_6 = arith.constant 0 : index
    %17 = vector.load %arg3[%c6, %c0_6] : memref<48x128xbf16, #tpu.memory_space<vmem>>, vector<1x128xbf16>
    %18 = vector.shape_cast %17 : vector<1x128xbf16> to vector<1x128xbf16>
    %19 = vector.broadcast %18 : vector<1x128xbf16> to vector<16x128xbf16>
    %20 = arith.extf %19 : vector<16x128xbf16> to vector<16x128xf32>
    %21 = arith.mulf %20, %16 : vector<16x128xf32>
    %22 = arith.addf %14, %21 : vector<16x128xf32>
    %c32 = arith.constant 32 : index
    %c0_7 = arith.constant 0 : index
    %23 = vector.load %arg2[%c32, %c0_7] : memref<96x128xbf16, #tpu.memory_space<vmem>>, vector<16x128xbf16>
    %24 = arith.extf %23 : vector<16x128xbf16> to vector<16x128xf32>
    %c12 = arith.constant 12 : index
    %c0_8 = arith.constant 0 : index
    %25 = vector.load %arg3[%c12, %c0_8] : memref<48x128xbf16, #tpu.memory_space<vmem>>, vector<1x128xbf16>
    %26 = vector.shape_cast %25 : vector<1x128xbf16> to vector<1x128xbf16>
    %27 = vector.broadcast %26 : vector<1x128xbf16> to vector<16x128xbf16>
    %28 = arith.extf %27 : vector<16x128xbf16> to vector<16x128xf32>
    %29 = arith.mulf %28, %24 : vector<16x128xf32>
    %30 = arith.addf %22, %29 : vector<16x128xf32>
    %c48 = arith.constant 48 : index
    %c0_9 = arith.constant 0 : index
    %31 = vector.load %arg2[%c48, %c0_9] : memref<96x128xbf16, #tpu.memory_space<vmem>>, vector<16x128xbf16>
    %32 = arith.extf %31 : vector<16x128xbf16> to vector<16x128xf32>
    %c18 = arith.constant 18 : index
    %c0_10 = arith.constant 0 : index
    %33 = vector.load %arg3[%c18, %c0_10] : memref<48x128xbf16, #tpu.memory_space<vmem>>, vector<1x128xbf16>
    %34 = vector.shape_cast %33 : vector<1x128xbf16> to vector<1x128xbf16>
    %35 = vector.broadcast %34 : vector<1x128xbf16> to vector<16x128xbf16>
    %36 = arith.extf %35 : vector<16x128xbf16> to vector<16x128xf32>
    %37 = arith.mulf %36, %32 : vector<16x128xf32>
    %38 = arith.addf %30, %37 : vector<16x128xf32>
    %c64 = arith.constant 64 : index
    %c0_11 = arith.constant 0 : index
    %39 = vector.load %arg2[%c64, %c0_11] : memref<96x128xbf16, #tpu.memory_space<vmem>>, vector<16x128xbf16>
    %40 = arith.extf %39 : vector<16x128xbf16> to vector<16x128xf32>
    %c24 = arith.constant 24 : index
    %c0_12 = arith.constant 0 : index
    %41 = vector.load %arg3[%c24, %c0_12] : memref<48x128xbf16, #tpu.memory_space<vmem>>, vector<1x128xbf16>
    %42 = vector.shape_cast %41 : vector<1x128xbf16> to vector<1x128xbf16>
    %43 = vector.broadcast %42 : vector<1x128xbf16> to vector<16x128xbf16>
    %44 = arith.extf %43 : vector<16x128xbf16> to vector<16x128xf32>
    %45 = arith.mulf %44, %40 : vector<16x128xf32>
    %46 = arith.addf %38, %45 : vector<16x128xf32>
    %c80 = arith.constant 80 : index
    %c0_13 = arith.constant 0 : index
    %47 = vector.load %arg2[%c80, %c0_13] : memref<96x128xbf16, #tpu.memory_space<vmem>>, vector<16x128xbf16>
    %48 = arith.extf %47 : vector<16x128xbf16> to vector<16x128xf32>
    %c30 = arith.constant 30 : index
    %c0_14 = arith.constant 0 : index
    %49 = vector.load %arg3[%c30, %c0_14] : memref<48x128xbf16, #tpu.memory_space<vmem>>, vector<1x128xbf16>
    %50 = vector.shape_cast %49 : vector<1x128xbf16> to vector<1x128xbf16>
    %51 = vector.broadcast %50 : vector<1x128xbf16> to vector<16x128xbf16>
    %52 = arith.extf %51 : vector<16x128xbf16> to vector<16x128xf32>
    %53 = arith.mulf %52, %48 : vector<16x128xf32>
    %54 = arith.addf %46, %53 : vector<16x128xf32>
    %cst = arith.constant 0.000000e+00 : f32
    %55 = vector.broadcast %cst : f32 to vector<16x128xf32>
    %56 = arith.maximumf %54, %55 : vector<16x128xf32>
    %c42 = arith.constant 42 : index
    %c0_15 = arith.constant 0 : index
    %57 = vector.load %arg3[%c42, %c0_15] : memref<48x128xbf16, #tpu.memory_space<vmem>>, vector<1x128xbf16>
    %58 = vector.shape_cast %57 : vector<1x128xbf16> to vector<1x128xbf16>
    %59 = vector.broadcast %58 : vector<1x128xbf16> to vector<16x128xbf16>
    %60 = arith.extf %59 : vector<16x128xbf16> to vector<16x128xf32>
    %61 = arith.mulf %56, %60 : vector<16x128xf32>
    %c37 = arith.constant 37 : index
    %c0_16 = arith.constant 0 : index
    %62 = vector.load %arg3[%c37, %c0_16] : memref<48x128xbf16, #tpu.memory_space<vmem>>, vector<1x128xbf16>
    %63 = vector.shape_cast %62 : vector<1x128xbf16> to vector<1x128xbf16>
    %64 = vector.broadcast %63 : vector<1x128xbf16> to vector<16x128xbf16>
    %65 = arith.extf %64 : vector<16x128xbf16> to vector<16x128xf32>
    %c0_17 = arith.constant 0 : index
    %c0_18 = arith.constant 0 : index
    %66 = vector.load %arg2[%c0_17, %c0_18] : memref<96x128xbf16, #tpu.memory_space<vmem>>, vector<16x128xbf16>
    %67 = arith.extf %66 : vector<16x128xbf16> to vector<16x128xf32>
    %c1 = arith.constant 1 : index
    %c0_19 = arith.constant 0 : index
    %68 = vector.load %arg3[%c1, %c0_19] : memref<48x128xbf16, #tpu.memory_space<vmem>>, vector<1x128xbf16>
    %69 = vector.shape_cast %68 : vector<1x128xbf16> to vector<1x128xbf16>
    %70 = vector.broadcast %69 : vector<1x128xbf16> to vector<16x128xbf16>
    %71 = arith.extf %70 : vector<16x128xbf16> to vector<16x128xf32>
    %72 = arith.mulf %71, %67 : vector<16x128xf32>
    %73 = arith.addf %65, %72 : vector<16x128xf32>
    %c16_20 = arith.constant 16 : index
    %c0_21 = arith.constant 0 : index
    %74 = vector.load %arg2[%c16_20, %c0_21] : memref<96x128xbf16, #tpu.memory_space<vmem>>, vector<16x128xbf16>
    %75 = arith.extf %74 : vector<16x128xbf16> to vector<16x128xf32>
    %c7 = arith.constant 7 : index
    %c0_22 = arith.constant 0 : index
    %76 = vector.load %arg3[%c7, %c0_22] : memref<48x128xbf16, #tpu.memory_space<vmem>>, vector<1x128xbf16>
    %77 = vector.shape_cast %76 : vector<1x128xbf16> to vector<1x128xbf16>
    %78 = vector.broadcast %77 : vector<1x128xbf16> to vector<16x128xbf16>
    %79 = arith.extf %78 : vector<16x128xbf16> to vector<16x128xf32>
    %80 = arith.mulf %79, %75 : vector<16x128xf32>
    %81 = arith.addf %73, %80 : vector<16x128xf32>
    %c32_23 = arith.constant 32 : index
    %c0_24 = arith.constant 0 : index
    %82 = vector.load %arg2[%c32_23, %c0_24] : memref<96x128xbf16, #tpu.memory_space<vmem>>, vector<16x128xbf16>
    %83 = arith.extf %82 : vector<16x128xbf16> to vector<16x128xf32>
    %c13 = arith.constant 13 : index
    %c0_25 = arith.constant 0 : index
    %84 = vector.load %arg3[%c13, %c0_25] : memref<48x128xbf16, #tpu.memory_space<vmem>>, vector<1x128xbf16>
    %85 = vector.shape_cast %84 : vector<1x128xbf16> to vector<1x128xbf16>
    %86 = vector.broadcast %85 : vector<1x128xbf16> to vector<16x128xbf16>
    %87 = arith.extf %86 : vector<16x128xbf16> to vector<16x128xf32>
    %88 = arith.mulf %87, %83 : vector<16x128xf32>
    %89 = arith.addf %81, %88 : vector<16x128xf32>
    %c48_26 = arith.constant 48 : index
    %c0_27 = arith.constant 0 : index
    %90 = vector.load %arg2[%c48_26, %c0_27] : memref<96x128xbf16, #tpu.memory_space<vmem>>, vector<16x128xbf16>
    %91 = arith.extf %90 : vector<16x128xbf16> to vector<16x128xf32>
    %c19 = arith.constant 19 : index
    %c0_28 = arith.constant 0 : index
    %92 = vector.load %arg3[%c19, %c0_28] : memref<48x128xbf16, #tpu.memory_space<vmem>>, vector<1x128xbf16>
    %93 = vector.shape_cast %92 : vector<1x128xbf16> to vector<1x128xbf16>
    %94 = vector.broadcast %93 : vector<1x128xbf16> to vector<16x128xbf16>
    %95 = arith.extf %94 : vector<16x128xbf16> to vector<16x128xf32>
    %96 = arith.mulf %95, %91 : vector<16x128xf32>
    %97 = arith.addf %89, %96 : vector<16x128xf32>
    %c64_29 = arith.constant 64 : index
    %c0_30 = arith.constant 0 : index
    %98 = vector.load %arg2[%c64_29, %c0_30] : memref<96x128xbf16, #tpu.memory_space<vmem>>, vector<16x128xbf16>
    %99 = arith.extf %98 : vector<16x128xbf16> to vector<16x128xf32>
    %c25 = arith.constant 25 : index
    %c0_31 = arith.constant 0 : index
    %100 = vector.load %arg3[%c25, %c0_31] : memref<48x128xbf16, #tpu.memory_space<vmem>>, vector<1x128xbf16>
    %101 = vector.shape_cast %100 : vector<1x128xbf16> to vector<1x128xbf16>
    %102 = vector.broadcast %101 : vector<1x128xbf16> to vector<16x128xbf16>
    %103 = arith.extf %102 : vector<16x128xbf16> to vector<16x128xf32>
    %104 = arith.mulf %103, %99 : vector<16x128xf32>
    %105 = arith.addf %97, %104 : vector<16x128xf32>
    %c80_32 = arith.constant 80 : index
    %c0_33 = arith.constant 0 : index
    %106 = vector.load %arg2[%c80_32, %c0_33] : memref<96x128xbf16, #tpu.memory_space<vmem>>, vector<16x128xbf16>
    %107 = arith.extf %106 : vector<16x128xbf16> to vector<16x128xf32>
    %c31 = arith.constant 31 : index
    %c0_34 = arith.constant 0 : index
    %108 = vector.load %arg3[%c31, %c0_34] : memref<48x128xbf16, #tpu.memory_space<vmem>>, vector<1x128xbf16>
    %109 = vector.shape_cast %108 : vector<1x128xbf16> to vector<1x128xbf16>
    %110 = vector.broadcast %109 : vector<1x128xbf16> to vector<16x128xbf16>
    %111 = arith.extf %110 : vector<16x128xbf16> to vector<16x128xf32>
    %112 = arith.mulf %111, %107 : vector<16x128xf32>
    %113 = arith.addf %105, %112 : vector<16x128xf32>
    %cst_35 = arith.constant 0.000000e+00 : f32
    %114 = vector.broadcast %cst_35 : f32 to vector<16x128xf32>
    %115 = arith.maximumf %113, %114 : vector<16x128xf32>
    %c43 = arith.constant 43 : index
    %c0_36 = arith.constant 0 : index
    %116 = vector.load %arg3[%c43, %c0_36] : memref<48x128xbf16, #tpu.memory_space<vmem>>, vector<1x128xbf16>
    %117 = vector.shape_cast %116 : vector<1x128xbf16> to vector<1x128xbf16>
    %118 = vector.broadcast %117 : vector<1x128xbf16> to vector<16x128xbf16>
    %119 = arith.extf %118 : vector<16x128xbf16> to vector<16x128xf32>
    %120 = arith.mulf %115, %119 : vector<16x128xf32>
    %121 = arith.addf %61, %120 : vector<16x128xf32>
    %c38 = arith.constant 38 : index
    %c0_37 = arith.constant 0 : index
    %122 = vector.load %arg3[%c38, %c0_37] : memref<48x128xbf16, #tpu.memory_space<vmem>>, vector<1x128xbf16>
    %123 = vector.shape_cast %122 : vector<1x128xbf16> to vector<1x128xbf16>
    %124 = vector.broadcast %123 : vector<1x128xbf16> to vector<16x128xbf16>
    %125 = arith.extf %124 : vector<16x128xbf16> to vector<16x128xf32>
    %c0_38 = arith.constant 0 : index
    %c0_39 = arith.constant 0 : index
    %126 = vector.load %arg2[%c0_38, %c0_39] : memref<96x128xbf16, #tpu.memory_space<vmem>>, vector<16x128xbf16>
    %127 = arith.extf %126 : vector<16x128xbf16> to vector<16x128xf32>
    %c2 = arith.constant 2 : index
    %c0_40 = arith.constant 0 : index
    %128 = vector.load %arg3[%c2, %c0_40] : memref<48x128xbf16, #tpu.memory_space<vmem>>, vector<1x128xbf16>
    %129 = vector.shape_cast %128 : vector<1x128xbf16> to vector<1x128xbf16>
    %130 = vector.broadcast %129 : vector<1x128xbf16> to vector<16x128xbf16>
    %131 = arith.extf %130 : vector<16x128xbf16> to vector<16x128xf32>
    %132 = arith.mulf %131, %127 : vector<16x128xf32>
    %133 = arith.addf %125, %132 : vector<16x128xf32>
    %c16_41 = arith.constant 16 : index
    %c0_42 = arith.constant 0 : index
    %134 = vector.load %arg2[%c16_41, %c0_42] : memref<96x128xbf16, #tpu.memory_space<vmem>>, vector<16x128xbf16>
    %135 = arith.extf %134 : vector<16x128xbf16> to vector<16x128xf32>
    %c8 = arith.constant 8 : index
    %c0_43 = arith.constant 0 : index
    %136 = vector.load %arg3[%c8, %c0_43] : memref<48x128xbf16, #tpu.memory_space<vmem>>, vector<1x128xbf16>
    %137 = vector.shape_cast %136 : vector<1x128xbf16> to vector<1x128xbf16>
    %138 = vector.broadcast %137 : vector<1x128xbf16> to vector<16x128xbf16>
    %139 = arith.extf %138 : vector<16x128xbf16> to vector<16x128xf32>
    %140 = arith.mulf %139, %135 : vector<16x128xf32>
    %141 = arith.addf %133, %140 : vector<16x128xf32>
    %c32_44 = arith.constant 32 : index
    %c0_45 = arith.constant 0 : index
    %142 = vector.load %arg2[%c32_44, %c0_45] : memref<96x128xbf16, #tpu.memory_space<vmem>>, vector<16x128xbf16>
    %143 = arith.extf %142 : vector<16x128xbf16> to vector<16x128xf32>
    %c14 = arith.constant 14 : index
    %c0_46 = arith.constant 0 : index
    %144 = vector.load %arg3[%c14, %c0_46] : memref<48x128xbf16, #tpu.memory_space<vmem>>, vector<1x128xbf16>
    %145 = vector.shape_cast %144 : vector<1x128xbf16> to vector<1x128xbf16>
    %146 = vector.broadcast %145 : vector<1x128xbf16> to vector<16x128xbf16>
    %147 = arith.extf %146 : vector<16x128xbf16> to vector<16x128xf32>
    %148 = arith.mulf %147, %143 : vector<16x128xf32>
    %149 = arith.addf %141, %148 : vector<16x128xf32>
    %c48_47 = arith.constant 48 : index
    %c0_48 = arith.constant 0 : index
    %150 = vector.load %arg2[%c48_47, %c0_48] : memref<96x128xbf16, #tpu.memory_space<vmem>>, vector<16x128xbf16>
    %151 = arith.extf %150 : vector<16x128xbf16> to vector<16x128xf32>
    %c20 = arith.constant 20 : index
    %c0_49 = arith.constant 0 : index
    %152 = vector.load %arg3[%c20, %c0_49] : memref<48x128xbf16, #tpu.memory_space<vmem>>, vector<1x128xbf16>
    %153 = vector.shape_cast %152 : vector<1x128xbf16> to vector<1x128xbf16>
    %154 = vector.broadcast %153 : vector<1x128xbf16> to vector<16x128xbf16>
    %155 = arith.extf %154 : vector<16x128xbf16> to vector<16x128xf32>
    %156 = arith.mulf %155, %151 : vector<16x128xf32>
    %157 = arith.addf %149, %156 : vector<16x128xf32>
    %c64_50 = arith.constant 64 : index
    %c0_51 = arith.constant 0 : index
    %158 = vector.load %arg2[%c64_50, %c0_51] : memref<96x128xbf16, #tpu.memory_space<vmem>>, vector<16x128xbf16>
    %159 = arith.extf %158 : vector<16x128xbf16> to vector<16x128xf32>
    %c26 = arith.constant 26 : index
    %c0_52 = arith.constant 0 : index
    %160 = vector.load %arg3[%c26, %c0_52] : memref<48x128xbf16, #tpu.memory_space<vmem>>, vector<1x128xbf16>
    %161 = vector.shape_cast %160 : vector<1x128xbf16> to vector<1x128xbf16>
    %162 = vector.broadcast %161 : vector<1x128xbf16> to vector<16x128xbf16>
    %163 = arith.extf %162 : vector<16x128xbf16> to vector<16x128xf32>
    %164 = arith.mulf %163, %159 : vector<16x128xf32>
    %165 = arith.addf %157, %164 : vector<16x128xf32>
    %c80_53 = arith.constant 80 : index
    %c0_54 = arith.constant 0 : index
    %166 = vector.load %arg2[%c80_53, %c0_54] : memref<96x128xbf16, #tpu.memory_space<vmem>>, vector<16x128xbf16>
    %167 = arith.extf %166 : vector<16x128xbf16> to vector<16x128xf32>
    %c32_55 = arith.constant 32 : index
    %c0_56 = arith.constant 0 : index
    %168 = vector.load %arg3[%c32_55, %c0_56] : memref<48x128xbf16, #tpu.memory_space<vmem>>, vector<1x128xbf16>
    %169 = vector.shape_cast %168 : vector<1x128xbf16> to vector<1x128xbf16>
    %170 = vector.broadcast %169 : vector<1x128xbf16> to vector<16x128xbf16>
    %171 = arith.extf %170 : vector<16x128xbf16> to vector<16x128xf32>
    %172 = arith.mulf %171, %167 : vector<16x128xf32>
    %173 = arith.addf %165, %172 : vector<16x128xf32>
    %cst_57 = arith.constant 0.000000e+00 : f32
    %174 = vector.broadcast %cst_57 : f32 to vector<16x128xf32>
    %175 = arith.maximumf %173, %174 : vector<16x128xf32>
    %c44 = arith.constant 44 : index
    %c0_58 = arith.constant 0 : index
    %176 = vector.load %arg3[%c44, %c0_58] : memref<48x128xbf16, #tpu.memory_space<vmem>>, vector<1x128xbf16>
    %177 = vector.shape_cast %176 : vector<1x128xbf16> to vector<1x128xbf16>
    %178 = vector.broadcast %177 : vector<1x128xbf16> to vector<16x128xbf16>
    %179 = arith.extf %178 : vector<16x128xbf16> to vector<16x128xf32>
    %180 = arith.mulf %175, %179 : vector<16x128xf32>
    %181 = arith.addf %121, %180 : vector<16x128xf32>
    %c39 = arith.constant 39 : index
    %c0_59 = arith.constant 0 : index
    %182 = vector.load %arg3[%c39, %c0_59] : memref<48x128xbf16, #tpu.memory_space<vmem>>, vector<1x128xbf16>
    %183 = vector.shape_cast %182 : vector<1x128xbf16> to vector<1x128xbf16>
    %184 = vector.broadcast %183 : vector<1x128xbf16> to vector<16x128xbf16>
    %185 = arith.extf %184 : vector<16x128xbf16> to vector<16x128xf32>
    %c0_60 = arith.constant 0 : index
    %c0_61 = arith.constant 0 : index
    %186 = vector.load %arg2[%c0_60, %c0_61] : memref<96x128xbf16, #tpu.memory_space<vmem>>, vector<16x128xbf16>
    %187 = arith.extf %186 : vector<16x128xbf16> to vector<16x128xf32>
    %c3 = arith.constant 3 : index
    %c0_62 = arith.constant 0 : index
    %188 = vector.load %arg3[%c3, %c0_62] : memref<48x128xbf16, #tpu.memory_space<vmem>>, vector<1x128xbf16>
    %189 = vector.shape_cast %188 : vector<1x128xbf16> to vector<1x128xbf16>
    %190 = vector.broadcast %189 : vector<1x128xbf16> to vector<16x128xbf16>
    %191 = arith.extf %190 : vector<16x128xbf16> to vector<16x128xf32>
    %192 = arith.mulf %191, %187 : vector<16x128xf32>
    %193 = arith.addf %185, %192 : vector<16x128xf32>
    %c16_63 = arith.constant 16 : index
    %c0_64 = arith.constant 0 : index
    %194 = vector.load %arg2[%c16_63, %c0_64] : memref<96x128xbf16, #tpu.memory_space<vmem>>, vector<16x128xbf16>
    %195 = arith.extf %194 : vector<16x128xbf16> to vector<16x128xf32>
    %c9 = arith.constant 9 : index
    %c0_65 = arith.constant 0 : index
    %196 = vector.load %arg3[%c9, %c0_65] : memref<48x128xbf16, #tpu.memory_space<vmem>>, vector<1x128xbf16>
    %197 = vector.shape_cast %196 : vector<1x128xbf16> to vector<1x128xbf16>
    %198 = vector.broadcast %197 : vector<1x128xbf16> to vector<16x128xbf16>
    %199 = arith.extf %198 : vector<16x128xbf16> to vector<16x128xf32>
    %200 = arith.mulf %199, %195 : vector<16x128xf32>
    %201 = arith.addf %193, %200 : vector<16x128xf32>
    %c32_66 = arith.constant 32 : index
    %c0_67 = arith.constant 0 : index
    %202 = vector.load %arg2[%c32_66, %c0_67] : memref<96x128xbf16, #tpu.memory_space<vmem>>, vector<16x128xbf16>
    %203 = arith.extf %202 : vector<16x128xbf16> to vector<16x128xf32>
    %c15 = arith.constant 15 : index
    %c0_68 = arith.constant 0 : index
    %204 = vector.load %arg3[%c15, %c0_68] : memref<48x128xbf16, #tpu.memory_space<vmem>>, vector<1x128xbf16>
    %205 = vector.shape_cast %204 : vector<1x128xbf16> to vector<1x128xbf16>
    %206 = vector.broadcast %205 : vector<1x128xbf16> to vector<16x128xbf16>
    %207 = arith.extf %206 : vector<16x128xbf16> to vector<16x128xf32>
    %208 = arith.mulf %207, %203 : vector<16x128xf32>
    %209 = arith.addf %201, %208 : vector<16x128xf32>
    %c48_69 = arith.constant 48 : index
    %c0_70 = arith.constant 0 : index
    %210 = vector.load %arg2[%c48_69, %c0_70] : memref<96x128xbf16, #tpu.memory_space<vmem>>, vector<16x128xbf16>
    %211 = arith.extf %210 : vector<16x128xbf16> to vector<16x128xf32>
    %c21 = arith.constant 21 : index
    %c0_71 = arith.constant 0 : index
    %212 = vector.load %arg3[%c21, %c0_71] : memref<48x128xbf16, #tpu.memory_space<vmem>>, vector<1x128xbf16>
    %213 = vector.shape_cast %212 : vector<1x128xbf16> to vector<1x128xbf16>
    %214 = vector.broadcast %213 : vector<1x128xbf16> to vector<16x128xbf16>
    %215 = arith.extf %214 : vector<16x128xbf16> to vector<16x128xf32>
    %216 = arith.mulf %215, %211 : vector<16x128xf32>
    %217 = arith.addf %209, %216 : vector<16x128xf32>
    %c64_72 = arith.constant 64 : index
    %c0_73 = arith.constant 0 : index
    %218 = vector.load %arg2[%c64_72, %c0_73] : memref<96x128xbf16, #tpu.memory_space<vmem>>, vector<16x128xbf16>
    %219 = arith.extf %218 : vector<16x128xbf16> to vector<16x128xf32>
    %c27 = arith.constant 27 : index
    %c0_74 = arith.constant 0 : index
    %220 = vector.load %arg3[%c27, %c0_74] : memref<48x128xbf16, #tpu.memory_space<vmem>>, vector<1x128xbf16>
    %221 = vector.shape_cast %220 : vector<1x128xbf16> to vector<1x128xbf16>
    %222 = vector.broadcast %221 : vector<1x128xbf16> to vector<16x128xbf16>
    %223 = arith.extf %222 : vector<16x128xbf16> to vector<16x128xf32>
    %224 = arith.mulf %223, %219 : vector<16x128xf32>
    %225 = arith.addf %217, %224 : vector<16x128xf32>
    %c80_75 = arith.constant 80 : index
    %c0_76 = arith.constant 0 : index
    %226 = vector.load %arg2[%c80_75, %c0_76] : memref<96x128xbf16, #tpu.memory_space<vmem>>, vector<16x128xbf16>
    %227 = arith.extf %226 : vector<16x128xbf16> to vector<16x128xf32>
    %c33 = arith.constant 33 : index
    %c0_77 = arith.constant 0 : index
    %228 = vector.load %arg3[%c33, %c0_77] : memref<48x128xbf16, #tpu.memory_space<vmem>>, vector<1x128xbf16>
    %229 = vector.shape_cast %228 : vector<1x128xbf16> to vector<1x128xbf16>
    %230 = vector.broadcast %229 : vector<1x128xbf16> to vector<16x128xbf16>
    %231 = arith.extf %230 : vector<16x128xbf16> to vector<16x128xf32>
    %232 = arith.mulf %231, %227 : vector<16x128xf32>
    %233 = arith.addf %225, %232 : vector<16x128xf32>
    %cst_78 = arith.constant 0.000000e+00 : f32
    %234 = vector.broadcast %cst_78 : f32 to vector<16x128xf32>
    %235 = arith.maximumf %233, %234 : vector<16x128xf32>
    %c45 = arith.constant 45 : index
    %c0_79 = arith.constant 0 : index
    %236 = vector.load %arg3[%c45, %c0_79] : memref<48x128xbf16, #tpu.memory_space<vmem>>, vector<1x128xbf16>
    %237 = vector.shape_cast %236 : vector<1x128xbf16> to vector<1x128xbf16>
    %238 = vector.broadcast %237 : vector<1x128xbf16> to vector<16x128xbf16>
    %239 = arith.extf %238 : vector<16x128xbf16> to vector<16x128xf32>
    %240 = arith.mulf %235, %239 : vector<16x128xf32>
    %241 = arith.addf %181, %240 : vector<16x128xf32>
    %c40 = arith.constant 40 : index
    %c0_80 = arith.constant 0 : index
    %242 = vector.load %arg3[%c40, %c0_80] : memref<48x128xbf16, #tpu.memory_space<vmem>>, vector<1x128xbf16>
    %243 = vector.shape_cast %242 : vector<1x128xbf16> to vector<1x128xbf16>
    %244 = vector.broadcast %243 : vector<1x128xbf16> to vector<16x128xbf16>
    %245 = arith.extf %244 : vector<16x128xbf16> to vector<16x128xf32>
    %c0_81 = arith.constant 0 : index
    %c0_82 = arith.constant 0 : index
    %246 = vector.load %arg2[%c0_81, %c0_82] : memref<96x128xbf16, #tpu.memory_space<vmem>>, vector<16x128xbf16>
    %247 = arith.extf %246 : vector<16x128xbf16> to vector<16x128xf32>
    %c4 = arith.constant 4 : index
    %c0_83 = arith.constant 0 : index
    %248 = vector.load %arg3[%c4, %c0_83] : memref<48x128xbf16, #tpu.memory_space<vmem>>, vector<1x128xbf16>
    %249 = vector.shape_cast %248 : vector<1x128xbf16> to vector<1x128xbf16>
    %250 = vector.broadcast %249 : vector<1x128xbf16> to vector<16x128xbf16>
    %251 = arith.extf %250 : vector<16x128xbf16> to vector<16x128xf32>
    %252 = arith.mulf %251, %247 : vector<16x128xf32>
    %253 = arith.addf %245, %252 : vector<16x128xf32>
    %c16_84 = arith.constant 16 : index
    %c0_85 = arith.constant 0 : index
    %254 = vector.load %arg2[%c16_84, %c0_85] : memref<96x128xbf16, #tpu.memory_space<vmem>>, vector<16x128xbf16>
    %255 = arith.extf %254 : vector<16x128xbf16> to vector<16x128xf32>
    %c10 = arith.constant 10 : index
    %c0_86 = arith.constant 0 : index
    %256 = vector.load %arg3[%c10, %c0_86] : memref<48x128xbf16, #tpu.memory_space<vmem>>, vector<1x128xbf16>
    %257 = vector.shape_cast %256 : vector<1x128xbf16> to vector<1x128xbf16>
    %258 = vector.broadcast %257 : vector<1x128xbf16> to vector<16x128xbf16>
    %259 = arith.extf %258 : vector<16x128xbf16> to vector<16x128xf32>
    %260 = arith.mulf %259, %255 : vector<16x128xf32>
    %261 = arith.addf %253, %260 : vector<16x128xf32>
    %c32_87 = arith.constant 32 : index
    %c0_88 = arith.constant 0 : index
    %262 = vector.load %arg2[%c32_87, %c0_88] : memref<96x128xbf16, #tpu.memory_space<vmem>>, vector<16x128xbf16>
    %263 = arith.extf %262 : vector<16x128xbf16> to vector<16x128xf32>
    %c16_89 = arith.constant 16 : index
    %c0_90 = arith.constant 0 : index
    %264 = vector.load %arg3[%c16_89, %c0_90] : memref<48x128xbf16, #tpu.memory_space<vmem>>, vector<1x128xbf16>
    %265 = vector.shape_cast %264 : vector<1x128xbf16> to vector<1x128xbf16>
    %266 = vector.broadcast %265 : vector<1x128xbf16> to vector<16x128xbf16>
    %267 = arith.extf %266 : vector<16x128xbf16> to vector<16x128xf32>
    %268 = arith.mulf %267, %263 : vector<16x128xf32>
    %269 = arith.addf %261, %268 : vector<16x128xf32>
    %c48_91 = arith.constant 48 : index
    %c0_92 = arith.constant 0 : index
    %270 = vector.load %arg2[%c48_91, %c0_92] : memref<96x128xbf16, #tpu.memory_space<vmem>>, vector<16x128xbf16>
    %271 = arith.extf %270 : vector<16x128xbf16> to vector<16x128xf32>
    %c22 = arith.constant 22 : index
    %c0_93 = arith.constant 0 : index
    %272 = vector.load %arg3[%c22, %c0_93] : memref<48x128xbf16, #tpu.memory_space<vmem>>, vector<1x128xbf16>
    %273 = vector.shape_cast %272 : vector<1x128xbf16> to vector<1x128xbf16>
    %274 = vector.broadcast %273 : vector<1x128xbf16> to vector<16x128xbf16>
    %275 = arith.extf %274 : vector<16x128xbf16> to vector<16x128xf32>
    %276 = arith.mulf %275, %271 : vector<16x128xf32>
    %277 = arith.addf %269, %276 : vector<16x128xf32>
    %c64_94 = arith.constant 64 : index
    %c0_95 = arith.constant 0 : index
    %278 = vector.load %arg2[%c64_94, %c0_95] : memref<96x128xbf16, #tpu.memory_space<vmem>>, vector<16x128xbf16>
    %279 = arith.extf %278 : vector<16x128xbf16> to vector<16x128xf32>
    %c28 = arith.constant 28 : index
    %c0_96 = arith.constant 0 : index
    %280 = vector.load %arg3[%c28, %c0_96] : memref<48x128xbf16, #tpu.memory_space<vmem>>, vector<1x128xbf16>
    %281 = vector.shape_cast %280 : vector<1x128xbf16> to vector<1x128xbf16>
    %282 = vector.broadcast %281 : vector<1x128xbf16> to vector<16x128xbf16>
    %283 = arith.extf %282 : vector<16x128xbf16> to vector<16x128xf32>
    %284 = arith.mulf %283, %279 : vector<16x128xf32>
    %285 = arith.addf %277, %284 : vector<16x128xf32>
    %c80_97 = arith.constant 80 : index
    %c0_98 = arith.constant 0 : index
    %286 = vector.load %arg2[%c80_97, %c0_98] : memref<96x128xbf16, #tpu.memory_space<vmem>>, vector<16x128xbf16>
    %287 = arith.extf %286 : vector<16x128xbf16> to vector<16x128xf32>
    %c34 = arith.constant 34 : index
    %c0_99 = arith.constant 0 : index
    %288 = vector.load %arg3[%c34, %c0_99] : memref<48x128xbf16, #tpu.memory_space<vmem>>, vector<1x128xbf16>
    %289 = vector.shape_cast %288 : vector<1x128xbf16> to vector<1x128xbf16>
    %290 = vector.broadcast %289 : vector<1x128xbf16> to vector<16x128xbf16>
    %291 = arith.extf %290 : vector<16x128xbf16> to vector<16x128xf32>
    %292 = arith.mulf %291, %287 : vector<16x128xf32>
    %293 = arith.addf %285, %292 : vector<16x128xf32>
    %cst_100 = arith.constant 0.000000e+00 : f32
    %294 = vector.broadcast %cst_100 : f32 to vector<16x128xf32>
    %295 = arith.maximumf %293, %294 : vector<16x128xf32>
    %c46 = arith.constant 46 : index
    %c0_101 = arith.constant 0 : index
    %296 = vector.load %arg3[%c46, %c0_101] : memref<48x128xbf16, #tpu.memory_space<vmem>>, vector<1x128xbf16>
    %297 = vector.shape_cast %296 : vector<1x128xbf16> to vector<1x128xbf16>
    %298 = vector.broadcast %297 : vector<1x128xbf16> to vector<16x128xbf16>
    %299 = arith.extf %298 : vector<16x128xbf16> to vector<16x128xf32>
    %300 = arith.mulf %295, %299 : vector<16x128xf32>
    %301 = arith.addf %241, %300 : vector<16x128xf32>
    %c41 = arith.constant 41 : index
    %c0_102 = arith.constant 0 : index
    %302 = vector.load %arg3[%c41, %c0_102] : memref<48x128xbf16, #tpu.memory_space<vmem>>, vector<1x128xbf16>
    %303 = vector.shape_cast %302 : vector<1x128xbf16> to vector<1x128xbf16>
    %304 = vector.broadcast %303 : vector<1x128xbf16> to vector<16x128xbf16>
    %305 = arith.extf %304 : vector<16x128xbf16> to vector<16x128xf32>
    %c0_103 = arith.constant 0 : index
    %c0_104 = arith.constant 0 : index
    %306 = vector.load %arg2[%c0_103, %c0_104] : memref<96x128xbf16, #tpu.memory_space<vmem>>, vector<16x128xbf16>
    %307 = arith.extf %306 : vector<16x128xbf16> to vector<16x128xf32>
    %c5 = arith.constant 5 : index
    %c0_105 = arith.constant 0 : index
    %308 = vector.load %arg3[%c5, %c0_105] : memref<48x128xbf16, #tpu.memory_space<vmem>>, vector<1x128xbf16>
    %309 = vector.shape_cast %308 : vector<1x128xbf16> to vector<1x128xbf16>
    %310 = vector.broadcast %309 : vector<1x128xbf16> to vector<16x128xbf16>
    %311 = arith.extf %310 : vector<16x128xbf16> to vector<16x128xf32>
    %312 = arith.mulf %311, %307 : vector<16x128xf32>
    %313 = arith.addf %305, %312 : vector<16x128xf32>
    %c16_106 = arith.constant 16 : index
    %c0_107 = arith.constant 0 : index
    %314 = vector.load %arg2[%c16_106, %c0_107] : memref<96x128xbf16, #tpu.memory_space<vmem>>, vector<16x128xbf16>
    %315 = arith.extf %314 : vector<16x128xbf16> to vector<16x128xf32>
    %c11 = arith.constant 11 : index
    %c0_108 = arith.constant 0 : index
    %316 = vector.load %arg3[%c11, %c0_108] : memref<48x128xbf16, #tpu.memory_space<vmem>>, vector<1x128xbf16>
    %317 = vector.shape_cast %316 : vector<1x128xbf16> to vector<1x128xbf16>
    %318 = vector.broadcast %317 : vector<1x128xbf16> to vector<16x128xbf16>
    %319 = arith.extf %318 : vector<16x128xbf16> to vector<16x128xf32>
    %320 = arith.mulf %319, %315 : vector<16x128xf32>
    %321 = arith.addf %313, %320 : vector<16x128xf32>
    %c32_109 = arith.constant 32 : index
    %c0_110 = arith.constant 0 : index
    %322 = vector.load %arg2[%c32_109, %c0_110] : memref<96x128xbf16, #tpu.memory_space<vmem>>, vector<16x128xbf16>
    %323 = arith.extf %322 : vector<16x128xbf16> to vector<16x128xf32>
    %c17 = arith.constant 17 : index
    %c0_111 = arith.constant 0 : index
    %324 = vector.load %arg3[%c17, %c0_111] : memref<48x128xbf16, #tpu.memory_space<vmem>>, vector<1x128xbf16>
    %325 = vector.shape_cast %324 : vector<1x128xbf16> to vector<1x128xbf16>
    %326 = vector.broadcast %325 : vector<1x128xbf16> to vector<16x128xbf16>
    %327 = arith.extf %326 : vector<16x128xbf16> to vector<16x128xf32>
    %328 = arith.mulf %327, %323 : vector<16x128xf32>
    %329 = arith.addf %321, %328 : vector<16x128xf32>
    %c48_112 = arith.constant 48 : index
    %c0_113 = arith.constant 0 : index
    %330 = vector.load %arg2[%c48_112, %c0_113] : memref<96x128xbf16, #tpu.memory_space<vmem>>, vector<16x128xbf16>
    %331 = arith.extf %330 : vector<16x128xbf16> to vector<16x128xf32>
    %c23 = arith.constant 23 : index
    %c0_114 = arith.constant 0 : index
    %332 = vector.load %arg3[%c23, %c0_114] : memref<48x128xbf16, #tpu.memory_space<vmem>>, vector<1x128xbf16>
    %333 = vector.shape_cast %332 : vector<1x128xbf16> to vector<1x128xbf16>
    %334 = vector.broadcast %333 : vector<1x128xbf16> to vector<16x128xbf16>
    %335 = arith.extf %334 : vector<16x128xbf16> to vector<16x128xf32>
    %336 = arith.mulf %335, %331 : vector<16x128xf32>
    %337 = arith.addf %329, %336 : vector<16x128xf32>
    %c64_115 = arith.constant 64 : index
    %c0_116 = arith.constant 0 : index
    %338 = vector.load %arg2[%c64_115, %c0_116] : memref<96x128xbf16, #tpu.memory_space<vmem>>, vector<16x128xbf16>
    %339 = arith.extf %338 : vector<16x128xbf16> to vector<16x128xf32>
    %c29 = arith.constant 29 : index
    %c0_117 = arith.constant 0 : index
    %340 = vector.load %arg3[%c29, %c0_117] : memref<48x128xbf16, #tpu.memory_space<vmem>>, vector<1x128xbf16>
    %341 = vector.shape_cast %340 : vector<1x128xbf16> to vector<1x128xbf16>
    %342 = vector.broadcast %341 : vector<1x128xbf16> to vector<16x128xbf16>
    %343 = arith.extf %342 : vector<16x128xbf16> to vector<16x128xf32>
    %344 = arith.mulf %343, %339 : vector<16x128xf32>
    %345 = arith.addf %337, %344 : vector<16x128xf32>
    %c80_118 = arith.constant 80 : index
    %c0_119 = arith.constant 0 : index
    %346 = vector.load %arg2[%c80_118, %c0_119] : memref<96x128xbf16, #tpu.memory_space<vmem>>, vector<16x128xbf16>
    %347 = arith.extf %346 : vector<16x128xbf16> to vector<16x128xf32>
    %c35 = arith.constant 35 : index
    %c0_120 = arith.constant 0 : index
    %348 = vector.load %arg3[%c35, %c0_120] : memref<48x128xbf16, #tpu.memory_space<vmem>>, vector<1x128xbf16>
    %349 = vector.shape_cast %348 : vector<1x128xbf16> to vector<1x128xbf16>
    %350 = vector.broadcast %349 : vector<1x128xbf16> to vector<16x128xbf16>
    %351 = arith.extf %350 : vector<16x128xbf16> to vector<16x128xf32>
    %352 = arith.mulf %351, %347 : vector<16x128xf32>
    %353 = arith.addf %345, %352 : vector<16x128xf32>
    %cst_121 = arith.constant 0.000000e+00 : f32
    %354 = vector.broadcast %cst_121 : f32 to vector<16x128xf32>
    %355 = arith.maximumf %353, %354 : vector<16x128xf32>
    %c47 = arith.constant 47 : index
    %c0_122 = arith.constant 0 : index
    %356 = vector.load %arg3[%c47, %c0_122] : memref<48x128xbf16, #tpu.memory_space<vmem>>, vector<1x128xbf16>
    %357 = vector.shape_cast %356 : vector<1x128xbf16> to vector<1x128xbf16>
    %358 = vector.broadcast %357 : vector<1x128xbf16> to vector<16x128xbf16>
    %359 = arith.extf %358 : vector<16x128xbf16> to vector<16x128xf32>
    %360 = arith.mulf %355, %359 : vector<16x128xf32>
    %361 = arith.addf %301, %360 : vector<16x128xf32>
    %c0_123 = arith.constant 0 : index
    %c0_124 = arith.constant 0 : index
    %362 = vector.load %arg5[%c0_123, %c0_124] : memref<16x128xf32, #tpu.memory_space<vmem>>, vector<16x128xf32>
    %363 = arith.addf %362, %361 : vector<16x128xf32>
    %c0_125 = arith.constant 0 : index
    %c0_126 = arith.constant 0 : index
    %364 = vector.load %arg5[%c0_125, %c0_126] : memref<16x128xf32, #tpu.memory_space<vmem>>, vector<16x128xf32>
    tpu.vector_store %arg5[%c0_125, %c0_126], %363 {strides = array<i32>} : memref<16x128xf32, #tpu.memory_space<vmem>>, vector<16x128xf32>,
    %c1_i32 = arith.constant 1 : i32
    %365 = arith.cmpi eq, %arg1, %c1_i32 : i32
    %366 = arith.extui %365 : i1 to i32
    %c0_i32_127 = arith.constant 0 : i32
    %367 = arith.cmpi ne, %366, %c0_i32_127 : i32
    scf.if %367 {
      %c0_128 = arith.constant 0 : index
      %c0_129 = arith.constant 0 : index
      %368 = vector.load %arg5[%c0_128, %c0_129] : memref<16x128xf32, #tpu.memory_space<vmem>>, vector<16x128xf32>
      %cst_130 = arith.constant dense<0.000000e+00> : vector<16xf32>
      %369 = vector.multi_reduction <add>, %368, %cst_130 [1] : vector<16x128xf32> to vector<16xf32>
      %370 = vector.shape_cast %369 : vector<16xf32> to vector<16x1xf32>
      %371 = vector.shape_cast %370 : vector<16x1xf32> to vector<1x16x1xf32>
      %372 = vector.broadcast %371 : vector<1x16x1xf32> to vector<1x16x128xf32>
      %c0_131 = arith.constant 0 : index
      %c0_132 = arith.constant 0 : index
      %c0_133 = arith.constant 0 : index
      %373 = vector.load %arg4[%c0_131, %c0_132, %c0_133] : memref<1x16x128xf32, #tpu.memory_space<vmem>>, vector<1x16x128xf32>
      tpu.vector_store %arg4[%c0_131, %c0_132, %c0_133], %372 {strides = array<i32>} : memref<1x16x128xf32, #tpu.memory_space<vmem>>, vector<1x16x128xf32>,
    } else {
    }
    return
  }
  func.func @transform_0(%arg0: i32, %arg1: i32) -> (i32, i32) {
    %c2_i32 = arith.constant 2 : i32
    %0 = arith.muli %arg0, %c2_i32 : i32
    %1 = arith.addi %0, %arg1 : i32
    %c0_i32 = arith.constant 0 : i32
    %c0_i32_0 = arith.constant 0 : i32
    return %c0_i32, %1 : i32, i32
  }
  func.func @transform_1(%arg0: i32, %arg1: i32) -> (i32, i32) {
    %c2_i32 = arith.constant 2 : i32
    %0 = arith.muli %arg0, %c2_i32 : i32
    %1 = arith.addi %0, %arg1 : i32
    %c0_i32 = arith.constant 0 : i32
    %c0_i32_0 = arith.constant 0 : i32
    return %c0_i32, %1 : i32, i32
  }
  func.func @transform_2(%arg0: i32, %arg1: i32) -> (i32, i32, i32) {
    %c0_i32 = arith.constant 0 : i32
    %c0_i32_0 = arith.constant 0 : i32
    %c0_i32_1 = arith.constant 0 : i32
    return %arg0, %c0_i32, %c0_i32_0 : i32, i32, i32
  }
}

</mosaic_0001>

<llo_original>
// kernel: tpu_custom_call.1
$region0: #{tpu_custom_call.1}
  #allocation0 [shape = 'u32[]', space=smem, size = 0x4, offset = 0x4, fixed_abs, tag = 'smem constant byte address 0x4 - core index']
  #allocation1 [shape = 'u32[144,128]{1,0:T(1,128)}', space=vmem, size = 0x12000, scoped, tag = 'internal scratch']
  #allocation2 [shape = 'f32[16,128]{1,0:T(8,128)}', space=vmem, size = 0x2000, scoped, tag = 'scratch operand']
  %s0 = inlined_call_operand.hbm [shape: bf16[96,512], index: 0, kind: input, shape index: {}]
  %s1 = inlined_call_operand.hbm [shape: bf16[48,512], index: 1, kind: input, shape index: {}]
  %s2 = inlined_call_operand.hbm [shape: f32[2,16,128], index: 2, kind: output, shape index: {}]
  %s3 = sld [smem:[#allocation0]]
  $region57: #{tpu_custom_call.1} parent=0
    _
  %s5 = ssub.s32 1, %s3
  %s6 = scalar_select 0, %s5, %s3
  $region1: #{tpu_custom_call.1} parent=0
    #allocation3 [shape = 'u8[49152]{0}', space=vmem, size = 0xc000, scoped, tag = 'input window, operand 0']
    #allocation4 [shape = 's32[2]{0}', space=sflag, size = 0x8, scoped, tag = 'scoped memory for tpu_custom_call.1']
    #allocation5 [shape = 's32[2]{0}', space=sflag, size = 0x8, scoped, tag = 'scoped memory for tpu_custom_call.1']
    #allocation6 [shape = 'u8[24576]{0}', space=vmem, size = 0x6000, scoped, tag = 'input window, operand 1']
    #allocation7 [shape = 's32[2]{0}', space=sflag, size = 0x8, scoped, tag = 'scoped memory for tpu_custom_call.1']
    #allocation8 [shape = 'u8[16384]{0}', space=vmem, size = 0x4000, scoped, tag = 'output window, operand 0']
    %7 = vsyncpa [#allocation4], 0
    %s8 = scalar_lea.sflag [#allocation4], 1
    %9 = vsyncpa %s8, 0
    %10 = vsyncpa [#allocation7], 0
    %s11 = scalar_lea.sflag [#allocation7], 1
    %12 = vsyncpa %s11, 0
    %13 = vsyncpa [#allocation5], 0
    %s14 = scalar_lea.sflag [#allocation5], 1
    %15 = vsyncpa %s14, 0
    loop: start=0, step=1, limit=6
    $region2: #{tpu_custom_call.1} parent=1 // loop_pre_header
      _
    $region3: #{tpu_custom_call.1} parent=1 // loop_header
      %s17 = sphi 0, %s21
      %p18 = scmp.ge.s32.totalorder %s17, 6
      %s24 = sphi 0, %s36
      %s25 = sphi 0, %s32
      %s26 = sphi 0, %s24
      %s27 = sphi 0, %s25
      %s28 = sphi 0, %s26
      %s29 = sphi 0, %s27
      %s43 = sphi 0, %s45
      %s46 = sphi 0, %s43
      %s47 = sphi 0, %s46
      %s63 = sphi 0, %s47
      %s73 = sphi 0, %s75
      %s76 = sphi 0, %s73
      %s77 = sphi 0, %s76
      %s93 = sphi 0, %s77
      %s99 = sphi 0, %s101
      %s102 = sphi 0, %s99
      %s103 = sphi 0, %s102
      %s119 = sphi 0, %s103
    $region4: #{tpu_custom_call.1} parent=1 // loop_header_branch
      %20 = sbr.rel (%p18) target = $region8
    $region5: #{tpu_custom_call.1} parent=1 // loop_body
      %s22 = ssub.s32 %s17, 1
      %s23 = ssub.s32 %s17, 2
      %s30 = sadd.s32 1, %s25
      %p31 = scmp.ge.s32.totalorder %s30, 2
      %s32 = scalar_select %p31, 0, %s30
      %s33 = sadd.s32 1, %s24
      %s34 = scalar_select %p31, %s33, %s24
      %p35 = scmp.ge.s32.totalorder %s34, 2
      %s36 = scalar_select %p35, 0, %s34
      %s37 = smul.u32 %s24, 2
      %s38 = sadd.s32 %s37, %s25
      %s39 = smul.u32 %s36, 2
      %s40 = sadd.s32 %s39, %s32
      %s41 = ssub.s32 %s38, %s40
      %p42 = scmp.eq.s32.totalorder %s41, 0
      %s44 = sadd.s32 %s43, 1
      %s45 = scalar_select %p42, %s43, %s44
      %p48 = pneg %p42
      %p49 = scmp.eq.s32.totalorder %s17, 3
      %p50 = por %p48, %p49
      %p51 = scmp.ne.s32.totalorder %s43, %s46
      %p52 = scmp.eq.s32.totalorder %s17, 0
      %p53 = por %p51, %p52
      %p54 = scmp.ne.s32.totalorder %s43, %s46
      %p55 = scmp.eq.s32.totalorder %s22, 3
      %p56 = por %p54, %p55
      %p57 = scmp.ne.s32.totalorder %s46, %s47
      %p58 = scmp.eq.s32.totalorder %s22, 0
      %p59 = por %p57, %p58
      %p60 = scmp.ne.s32.totalorder %s46, %s47
      %p61 = scmp.eq.s32.totalorder %s23, 3
      %p62 = por %p60, %p61
      %p64 = scmp.ne.s32.totalorder %s47, %s63
      %p65 = scmp.eq.s32.totalorder %s23, 0
      %p66 = por %p64, %p65
      %s67 = smul.u32 %s24, 2
      %s68 = sadd.s32 %s67, %s25
      %s69 = smul.u32 %s36, 2
      %s70 = sadd.s32 %s69, %s32
      %s71 = ssub.s32 %s68, %s70
      %p72 = scmp.eq.s32.totalorder %s71, 0
      %s74 = sadd.s32 %s73, 1
      %s75 = scalar_select %p72, %s73, %s74
      %p78 = pneg %p72
      %p79 = scmp.eq.s32.totalorder %s17, 3
      %p80 = por %p78, %p79
      %p81 = scmp.ne.s32.totalorder %s73, %s76
      %p82 = scmp.eq.s32.totalorder %s17, 0
      %p83 = por %p81, %p82
      %p84 = scmp.ne.s32.totalorder %s73, %s76
      %p85 = scmp.eq.s32.totalorder %s22, 3
      %p86 = por %p84, %p85
      %p87 = scmp.ne.s32.totalorder %s76, %s77
      %p88 = scmp.eq.s32.totalorder %s22, 0
      %p89 = por %p87, %p88
      %p90 = scmp.ne.s32.totalorder %s76, %s77
      %p91 = scmp.eq.s32.totalorder %s23, 3
      %p92 = por %p90, %p91
      %p94 = scmp.ne.s32.totalorder %s77, %s93
      %p95 = scmp.eq.s32.totalorder %s23, 0
      %p96 = por %p94, %p95
      %s97 = ssub.s32 %s24, %s36
      %p98 = scmp.eq.s32.totalorder %s97, 0
      %s100 = sadd.s32 %s99, 1
      %s101 = scalar_select %p98, %s99, %s100
      %p104 = pneg %p98
      %p105 = scmp.eq.s32.totalorder %s17, 3
      %p106 = por %p104, %p105
      %p107 = scmp.ne.s32.totalorder %s99, %s102
      %p108 = scmp.eq.s32.totalorder %s17, 0
      %p109 = por %p107, %p108
      %p110 = scmp.ne.s32.totalorder %s99, %s102
      %p111 = scmp.eq.s32.totalorder %s22, 3
      %p112 = por %p110, %p111
      %p113 = scmp.ne.s32.totalorder %s102, %s103
      %p114 = scmp.eq.s32.totalorder %s22, 0
      %p115 = por %p113, %p114
      %p116 = scmp.ne.s32.totalorder %s102, %s103
      %p117 = scmp.eq.s32.totalorder %s23, 3
      %p118 = por %p116, %p117
      %p120 = scmp.ne.s32.totalorder %s103, %s119
      %p121 = scmp.eq.s32.totalorder %s23, 0
      %p122 = por %p120, %p121
      %p123 = scmp.le.s32.totalorder 1, %s17
      %p124 = scmp.lt.s32.totalorder %s17, 5
      %p125 = pnand %p123, %p124
      %p126 = pneg %p125
      // Predicated region
      $region9: #{tpu_custom_call.1} parent=5 // pred_check
        _
      $region10: #{tpu_custom_call.1} parent=5 // pred_check_branch
        %128 = sbr.rel (%p125) target = $region12
      $region11: #{tpu_custom_call.1} parent=5 // pred_region
        %s129 = ssub.s32 %s17, 1
      $region12: #{tpu_custom_call.1} parent=5 // pred_fallthru
        _
      %p130 = scmp.lt.s32.totalorder %s17, 4
      // Predicated region
      $region13: #{tpu_custom_call.1} parent=5 // pred_check
        %p131 = pneg %p130
      $region14: #{tpu_custom_call.1} parent=5 // pred_check_branch
        %133 = sbr.rel (%p131) target = $region16
      $region15: #{tpu_custom_call.1} parent=5 // pred_region
        // Predicated region
        $region17: #{tpu_custom_call.1} parent=15 // pred_check
          %p134 = pneg %p53
        $region18: #{tpu_custom_call.1} parent=15 // pred_check_branch
          %136 = sbr.rel (%p134) target = $region20
        $region19: #{tpu_custom_call.1} parent=15 // pred_region
          %s137 = sand.u32 %s43, 1
          %s138 = scalar_lea.sflag [#allocation4], %s137
          %s139 = sand.u32 %s43, 1
          %s140 = smul.addr %s139, 48
          %s141 = scalar_lea.vmem [#allocation3], %s140
          %s142 = smul.u32 %s24, 2
          %s143 = sadd.s32 %s142, %s25
          %s145 = ssub.s32 768, 768
          %146 = vsyncadd %s138, %s145
          %s147 = smul.addr %s143, 64
          %s148 = scalar_lea.hbm %s0, %s147
          %s149 = sshll.u32 %s141, 4
          %s150 = int_to_ptr.vmem [resolvable:$true] %s149
          %155 = dma.hbm_to_vmem [thread:$0]  %s148, 768, %s150, %s138, 256, 64, 4
        $region20: #{tpu_custom_call.1} parent=15 // pred_fallthru
          _
        // Predicated region
        $region21: #{tpu_custom_call.1} parent=15 // pred_check
          %p156 = pneg %p83
        $region22: #{tpu_custom_call.1} parent=15 // pred_check_branch
          %158 = sbr.rel (%p156) target = $region24
        $region23: #{tpu_custom_call.1} parent=15 // pred_region
          %s159 = sand.u32 %s73, 1
          %s160 = scalar_lea.sflag [#allocation7], %s159
          %s161 = sand.u32 %s73, 1
          %s162 = smul.addr %s161, 24
          %s163 = scalar_lea.vmem [#allocation6], %s162
          %s164 = smul.u32 %s24, 2
          %s165 = sadd.s32 %s164, %s25
          %s167 = ssub.s32 384, 384
          %168 = vsyncadd %s160, %s167
          %s169 = smul.addr %s165, 64
          %s170 = scalar_lea.hbm %s1, %s169
          %s171 = sshll.u32 %s163, 4
          %s172 = int_to_ptr.vmem [resolvable:$true] %s171
          %177 = dma.hbm_to_vmem [thread:$0]  %s170, 384, %s172, %s160, 256, 64, 4
        $region24: #{tpu_custom_call.1} parent=15 // pred_fallthru
          _
      $region16: #{tpu_custom_call.1} parent=5 // pred_fallthru
        _
      %p178 = scmp.le.s32.totalorder 1, %s17
      %p179 = scmp.lt.s32.totalorder %s17, 5
      %p180 = pnand %p178, %p179
      %p181 = pneg %p180
      // Predicated region
      $region25: #{tpu_custom_call.1} parent=5 // pred_check
        _
      $region26: #{tpu_custom_call.1} parent=5 // pred_check_branch
        %183 = sbr.rel (%p180) target = $region28
      $region27: #{tpu_custom_call.1} parent=5 // pred_region
        %s184 = ssub.s32 %s17, 1
        %s185 = sand.u32 %s46, 1
        %s186 = scalar_lea.sflag [#allocation4], %s185
        %s187 = sand.u32 %s46, 1
        %s188 = smul.addr %s187, 48
        %s189 = scalar_lea.vmem [#allocation3], %s188
        // Predicated region
        $region29: #{tpu_custom_call.1} parent=27 // pred_check
          %p190 = pneg %p59
        $region30: #{tpu_custom_call.1} parent=27 // pred_check_branch
          %192 = sbr.rel (%p190) target = $region32
        $region31: #{tpu_custom_call.1} parent=27 // pred_region
          %193 = dma.done %s186, 768
        $region32: #{tpu_custom_call.1} parent=27 // pred_fallthru
          _
        %s194 = sand.u32 %s76, 1
        %s195 = scalar_lea.sflag [#allocation7], %s194
        %s196 = sand.u32 %s76, 1
        %s197 = smul.addr %s196, 24
        %s198 = scalar_lea.vmem [#allocation6], %s197
        // Predicated region
        $region33: #{tpu_custom_call.1} parent=27 // pred_check
          %p199 = pneg %p89
        $region34: #{tpu_custom_call.1} parent=27 // pred_check_branch
          %201 = sbr.rel (%p199) target = $region36
        $region35: #{tpu_custom_call.1} parent=27 // pred_region
          %202 = dma.done %s195, 384
        $region36: #{tpu_custom_call.1} parent=27 // pred_fallthru
          _
        %s203 = sand.u32 %s46, 1
        %s204 = scalar_lea.sflag [#allocation4], %s203
        %s205 = sand.u32 %s46, 1
        %s206 = smul.addr %s205, 48
        %s207 = scalar_lea.vmem [#allocation3], %s206
        %p208 = pneg %p59
        %p209 = pneg %p56
        %s210 = sand.u32 %s76, 1
        %s211 = scalar_lea.sflag [#allocation7], %s210
        %s212 = sand.u32 %s76, 1
        %s213 = smul.addr %s212, 24
        %s214 = scalar_lea.vmem [#allocation6], %s213
        %p215 = pneg %p89
        %p216 = pneg %p86
        %p217 = pneg %p115
        %p218 = pneg %p112
        %s219 = sand.u32 %s102, 1
        %s220 = scalar_lea.sflag [#allocation5], %s219
        %s221 = sand.u32 %s102, 1
        %s222 = smul.addr %s221, 16
        %s223 = scalar_lea.vmem [#allocation8], %s222
        %s224 = smul.u32 %s26, 2
        %s225 = sadd.s32 %s224, %s27
        %s226 = smul.u32 %s26, 2
        %s227 = sadd.s32 %s226, %s27
        %p228 = scmp.eq.s32.totalorder %s27, 0
        // Predicated region
        $region37: #{tpu_custom_call.1} parent=27 // pred_check
          %p229 = pneg %p228
        $region38: #{tpu_custom_call.1} parent=27 // pred_check_branch
          %231 = sbr.rel (%p229) target = $region40
        $region39: #{tpu_custom_call.1} parent=27 // pred_region
          %232 = vst [vmem:[#allocation2] sm:$0xff] 0.0
          %233 = vst [vmem:[#allocation2 + $0x8] sm:$0xff] 0.0
        $region40: #{tpu_custom_call.1} parent=27 // pred_fallthru
          _
        %v234 = vld [vmem:[%s198 + $0x10] sm:$0x4]
        %v236 = vpack.i.b16 %v234, %v234
        %v238 = vlaneseq
        %v239 = vshrl.u32 %v238, 7
        %v240 = vsub.s32 2, %v239
        %v241 = vrot.slane %v236, %v240
        %v242 = vunpack.c.l.bf16 %v241
        %v243 = vld [vmem:[%s189] sm:$0xf]
        %v244 = vld [vmem:[%s189 + $0x4] sm:$0xf]
        %v245 = vunpack.c.l.bf16 %v243
        %v246 = vunpack.c.l.bf16 %v244
        %v247 = vld [vmem:[%s198] sm:$0x1]
        %v249 = vpack.i.b16 %v247, %v247
        %v251 = vlaneseq
        %v252 = vshrl.u32 %v251, 7
        %v253 = vsub.s32 0, %v252
        %v254 = vrot.slane %v249, %v253
        %v255 = vunpack.c.l.bf16 %v254
        %v256 = vmul.f32 %v255, %v245
        %v257 = vmul.f32 %v255, %v246
        %v258 = vadd.f32 %v242, %v256
        %v259 = vadd.f32 %v242, %v257
        %v260 = vld [vmem:[%s189 + $0x8] sm:$0xf]
        %v261 = vld [vmem:[%s189 + $0xc] sm:$0xf]
        %v262 = vunpack.c.l.bf16 %v260
        %v263 = vunpack.c.l.bf16 %v261
        %v264 = vld [vmem:[%s198] sm:$0x8]
        %v266 = vpack.i.b16 %v264, %v264
        %v268 = vlaneseq
        %v269 = vshrl.u32 %v268, 7
        %v270 = vsub.s32 3, %v269
        %v271 = vrot.slane %v266, %v270
        %v272 = vunpack.c.l.bf16 %v271
        %v273 = vmul.f32 %v272, %v262
        %v274 = vmul.f32 %v272, %v263
        %v275 = vadd.f32 %v258, %v273
        %v276 = vadd.f32 %v259, %v274
        %v277 = vld [vmem:[%s189 + $0x10] sm:$0xf]
        %v278 = vld [vmem:[%s189 + $0x14] sm:$0xf]
        %v279 = vunpack.c.l.bf16 %v277
        %v280 = vunpack.c.l.bf16 %v278
        %v281 = vld [vmem:[%s198 + $0x4] sm:$0x4]
        %v283 = vpack.i.b16 %v281, %v281
        %v285 = vlaneseq
        %v286 = vshrl.u32 %v285, 7
        %v287 = vsub.s32 2, %v286
        %v288 = vrot.slane %v283, %v287
        %v289 = vunpack.c.l.bf16 %v288
        %v290 = vmul.f32 %v289, %v279
        %v291 = vmul.f32 %v289, %v280
        %v292 = vadd.f32 %v275, %v290
        %v293 = vadd.f32 %v276, %v291
        %v294 = vld [vmem:[%s189 + $0x18] sm:$0xf]
        %v295 = vld [vmem:[%s189 + $0x1c] sm:$0xf]
        %v296 = vunpack.c.l.bf16 %v294
        %v297 = vunpack.c.l.bf16 %v295
        %v298 = vld [vmem:[%s198 + $0x8] sm:$0x2]
        %v300 = vpack.i.b16 %v298, %v298
        %v302 = vlaneseq
        %v303 = vshrl.u32 %v302, 7
        %v304 = vsub.s32 1, %v303
        %v305 = vrot.slane %v300, %v304
        %v306 = vunpack.c.l.bf16 %v305
        %v307 = vmul.f32 %v306, %v296
        %v308 = vmul.f32 %v306, %v297
        %v309 = vadd.f32 %v292, %v307
        %v310 = vadd.f32 %v293, %v308
        %v311 = vld [vmem:[%s189 + $0x20] sm:$0xf]
        %v312 = vld [vmem:[%s189 + $0x24] sm:$0xf]
        %v313 = vunpack.c.l.bf16 %v311
        %v314 = vunpack.c.l.bf16 %v312
        %v315 = vld [vmem:[%s198 + $0xc] sm:$0x1]
        %v317 = vpack.i.b16 %v315, %v315
        %v319 = vlaneseq
        %v320 = vshrl.u32 %v319, 7
        %v321 = vsub.s32 0, %v320
        %v322 = vrot.slane %v317, %v321
        %v323 = vunpack.c.l.bf16 %v322
        %v324 = vmul.f32 %v323, %v313
        %v325 = vmul.f32 %v323, %v314
        %v326 = vadd.f32 %v309, %v324
        %v327 = vadd.f32 %v310, %v325
        %v328 = vld [vmem:[%s189 + $0x28] sm:$0xf]
        %v329 = vld [vmem:[%s189 + $0x2c] sm:$0xf]
        %v330 = vunpack.c.l.bf16 %v328
        %v331 = vunpack.c.l.bf16 %v329
        %v332 = vld [vmem:[%s198 + $0xc] sm:$0x8]
        %v334 = vpack.i.b16 %v332, %v332
        %v336 = vlaneseq
        %v337 = vshrl.u32 %v336, 7
        %v338 = vsub.s32 3, %v337
        %v339 = vrot.slane %v334, %v338
        %v340 = vunpack.c.l.bf16 %v339
        %v341 = vmul.f32 %v340, %v330
        %v342 = vmul.f32 %v340, %v331
        %v343 = vadd.f32 %v326, %v341
        %v344 = vadd.f32 %v327, %v342
        %v345 = vmax.f32 %v343, 0.0
        %v346 = vmax.f32 %v344, 0.0
        %v347 = vld [vmem:[%s198 + $0x14] sm:$0x2]
        %v349 = vpack.i.b16 %v347, %v347
        %v351 = vlaneseq
        %v352 = vshrl.u32 %v351, 7
        %v353 = vsub.s32 1, %v352
        %v354 = vrot.slane %v349, %v353
        %v355 = vunpack.c.l.bf16 %v354
        %v356 = vmul.f32 %v345, %v355
        %v357 = vmul.f32 %v346, %v355
        %v358 = vshrl.u32 %v234, 16
        %v359 = vpack.i.b16 %v358, %v358
        %v361 = vlaneseq
        %v362 = vshrl.u32 %v361, 7
        %v363 = vsub.s32 2, %v362
        %v364 = vrot.slane %v359, %v363
        %v365 = vunpack.c.l.bf16 %v364
        %v366 = vshrl.u32 %v247, 16
        %v367 = vpack.i.b16 %v366, %v366
        %v369 = vlaneseq
        %v370 = vshrl.u32 %v369, 7
        %v371 = vsub.s32 0, %v370
        %v372 = vrot.slane %v367, %v371
        %v373 = vunpack.c.l.bf16 %v372
        %v374 = vmul.f32 %v373, %v245
        %v375 = vmul.f32 %v373, %v246
        %v376 = vadd.f32 %v365, %v374
        %v377 = vadd.f32 %v365, %v375
        %v378 = vshrl.u32 %v264, 16
        %v379 = vpack.i.b16 %v378, %v378
        %v381 = vlaneseq
        %v382 = vshrl.u32 %v381, 7
        %v383 = vsub.s32 3, %v382
        %v384 = vrot.slane %v379, %v383
        %v385 = vunpack.c.l.bf16 %v384
        %v386 = vmul.f32 %v385, %v262
        %v387 = vmul.f32 %v385, %v263
        %v388 = vadd.f32 %v376, %v386
        %v389 = vadd.f32 %v377, %v387
        %v390 = vshrl.u32 %v281, 16
        %v391 = vpack.i.b16 %v390, %v390
        %v393 = vlaneseq
        %v394 = vshrl.u32 %v393, 7
        %v395 = vsub.s32 2, %v394
        %v396 = vrot.slane %v391, %v395
        %v397 = vunpack.c.l.bf16 %v396
        %v398 = vmul.f32 %v397, %v279
        %v399 = vmul.f32 %v397, %v280
        %v400 = vadd.f32 %v388, %v398
        %v401 = vadd.f32 %v389, %v399
        %v402 = vshrl.u32 %v298, 16
        %v403 = vpack.i.b16 %v402, %v402
        %v405 = vlaneseq
        %v406 = vshrl.u32 %v405, 7
        %v407 = vsub.s32 1, %v406
        %v408 = vrot.slane %v403, %v407
        %v409 = vunpack.c.l.bf16 %v408
        %v410 = vmul.f32 %v409, %v296
        %v411 = vmul.f32 %v409, %v297
        %v412 = vadd.f32 %v400, %v410
        %v413 = vadd.f32 %v401, %v411
        %v414 = vshrl.u32 %v315, 16
        %v415 = vpack.i.b16 %v414, %v414
        %v417 = vlaneseq
        %v418 = vshrl.u32 %v417, 7
        %v419 = vsub.s32 0, %v418
        %v420 = vrot.slane %v415, %v419
        %v421 = vunpack.c.l.bf16 %v420
        %v422 = vmul.f32 %v421, %v313
        %v423 = vmul.f32 %v421, %v314
        %v424 = vadd.f32 %v412, %v422
        %v425 = vadd.f32 %v413, %v423
        %v426 = vshrl.u32 %v332, 16
        %v427 = vpack.i.b16 %v426, %v426
        %v429 = vlaneseq
        %v430 = vshrl.u32 %v429, 7
        %v431 = vsub.s32 3, %v430
        %v432 = vrot.slane %v427, %v431
        %v433 = vunpack.c.l.bf16 %v432
        %v434 = vmul.f32 %v433, %v330
        %v435 = vmul.f32 %v433, %v331
        %v436 = vadd.f32 %v424, %v434
        %v437 = vadd.f32 %v425, %v435
        %v438 = vmax.f32 %v436, 0.0
        %v439 = vmax.f32 %v437, 0.0
        %v440 = vshrl.u32 %v347, 16
        %v441 = vpack.i.b16 %v440, %v440
        %v443 = vlaneseq
        %v444 = vshrl.u32 %v443, 7
        %v445 = vsub.s32 1, %v444
        %v446 = vrot.slane %v441, %v445
        %v447 = vunpack.c.l.bf16 %v446
        %v448 = vmul.f32 %v438, %v447
        %v449 = vmul.f32 %v439, %v447
        %v450 = vadd.f32 %v356, %v448
        %v451 = vadd.f32 %v357, %v449
        %v452 = vld [vmem:[%s198 + $0x10] sm:$0x8]
        %v454 = vpack.i.b16 %v452, %v452
        %v456 = vlaneseq
        %v457 = vshrl.u32 %v456, 7
        %v458 = vsub.s32 3, %v457
        %v459 = vrot.slane %v454, %v458
        %v460 = vunpack.c.l.bf16 %v459
        %v461 = vld [vmem:[%s198] sm:$0x2]
        %v463 = vpack.i.b16 %v461, %v461
        %v465 = vlaneseq
        %v466 = vshrl.u32 %v465, 7
        %v467 = vsub.s32 1, %v466
        %v468 = vrot.slane %v463, %v467
        %v469 = vunpack.c.l.bf16 %v468
        %v470 = vmul.f32 %v469, %v245
        %v471 = vmul.f32 %v469, %v246
        %v472 = vadd.f32 %v460, %v470
        %v473 = vadd.f32 %v460, %v471
        %v474 = vld [vmem:[%s198 + $0x4] sm:$0x1]
        %v476 = vpack.i.b16 %v474, %v474
        %v478 = vlaneseq
        %v479 = vshrl.u32 %v478, 7
        %v480 = vsub.s32 0, %v479
        %v481 = vrot.slane %v476, %v480
        %v482 = vunpack.c.l.bf16 %v481
        %v483 = vmul.f32 %v482, %v262
        %v484 = vmul.f32 %v482, %v263
        %v485 = vadd.f32 %v472, %v483
        %v486 = vadd.f32 %v473, %v484
        %v487 = vld [vmem:[%s198 + $0x4] sm:$0x8]
        %v489 = vpack.i.b16 %v487, %v487
        %v491 = vlaneseq
        %v492 = vshrl.u32 %v491, 7
        %v493 = vsub.s32 3, %v492
        %v494 = vrot.slane %v489, %v493
        %v495 = vunpack.c.l.bf16 %v494
        %v496 = vmul.f32 %v495, %v279
        %v497 = vmul.f32 %v495, %v280
        %v498 = vadd.f32 %v485, %v496
        %v499 = vadd.f32 %v486, %v497
        %v500 = vld [vmem:[%s198 + $0x8] sm:$0x4]
        %v502 = vpack.i.b16 %v500, %v500
        %v504 = vlaneseq
        %v505 = vshrl.u32 %v504, 7
        %v506 = vsub.s32 2, %v505
        %v507 = vrot.slane %v502, %v506
        %v508 = vunpack.c.l.bf16 %v507
        %v509 = vmul.f32 %v508, %v296
        %v510 = vmul.f32 %v508, %v297
        %v511 = vadd.f32 %v498, %v509
        %v512 = vadd.f32 %v499, %v510
        %v513 = vld [vmem:[%s198 + $0xc] sm:$0x2]
        %v515 = vpack.i.b16 %v513, %v513
        %v517 = vlaneseq
        %v518 = vshrl.u32 %v517, 7
        %v519 = vsub.s32 1, %v518
        %v520 = vrot.slane %v515, %v519
        %v521 = vunpack.c.l.bf16 %v520
        %v522 = vmul.f32 %v521, %v313
        %v523 = vmul.f32 %v521, %v314
        %v524 = vadd.f32 %v511, %v522
        %v525 = vadd.f32 %v512, %v523
        %v526 = vld [vmem:[%s198 + $0x10] sm:$0x1]
        %v528 = vpack.i.b16 %v526, %v526
        %v530 = vlaneseq
        %v531 = vshrl.u32 %v530, 7
        %v532 = vsub.s32 0, %v531
        %v533 = vrot.slane %v528, %v532
        %v534 = vunpack.c.l.bf16 %v533
        %v535 = vmul.f32 %v534, %v330
        %v536 = vmul.f32 %v534, %v331
        %v537 = vadd.f32 %v524, %v535
        %v538 = vadd.f32 %v525, %v536
        %v539 = vmax.f32 %v537, 0.0
        %v540 = vmax.f32 %v538, 0.0
        %v541 = vld [vmem:[%s198 + $0x14] sm:$0x4]
        %v543 = vpack.i.b16 %v541, %v541
        %v545 = vlaneseq
        %v546 = vshrl.u32 %v545, 7
        %v547 = vsub.s32 2, %v546
        %v548 = vrot.slane %v543, %v547
        %v549 = vunpack.c.l.bf16 %v548
        %v550 = vmul.f32 %v539, %v549
        %v551 = vmul.f32 %v540, %v549
        %v552 = vadd.f32 %v450, %v550
        %v553 = vadd.f32 %v451, %v551
        %v554 = vshrl.u32 %v452, 16
        %v555 = vpack.i.b16 %v554, %v554
        %v557 = vlaneseq
        %v558 = vshrl.u32 %v557, 7
        %v559 = vsub.s32 3, %v558
        %v560 = vrot.slane %v555, %v559
        %v561 = vunpack.c.l.bf16 %v560
        %v562 = vshrl.u32 %v461, 16
        %v563 = vpack.i.b16 %v562, %v562
        %v565 = vlaneseq
        %v566 = vshrl.u32 %v565, 7
        %v567 = vsub.s32 1, %v566
        %v568 = vrot.slane %v563, %v567
        %v569 = vunpack.c.l.bf16 %v568
        %v570 = vmul.f32 %v569, %v245
        %v571 = vmul.f32 %v569, %v246
        %v572 = vadd.f32 %v561, %v570
        %v573 = vadd.f32 %v561, %v571
        %v574 = vshrl.u32 %v474, 16
        %v575 = vpack.i.b16 %v574, %v574
        %v577 = vlaneseq
        %v578 = vshrl.u32 %v577, 7
        %v579 = vsub.s32 0, %v578
        %v580 = vrot.slane %v575, %v579
        %v581 = vunpack.c.l.bf16 %v580
        %v582 = vmul.f32 %v581, %v262
        %v583 = vmul.f32 %v581, %v263
        %v584 = vadd.f32 %v572, %v582
        %v585 = vadd.f32 %v573, %v583
        %v586 = vshrl.u32 %v487, 16
        %v587 = vpack.i.b16 %v586, %v586
        %v589 = vlaneseq
        %v590 = vshrl.u32 %v589, 7
        %v591 = vsub.s32 3, %v590
        %v592 = vrot.slane %v587, %v591
        %v593 = vunpack.c.l.bf16 %v592
        %v594 = vmul.f32 %v593, %v279
        %v595 = vmul.f32 %v593, %v280
        %v596 = vadd.f32 %v584, %v594
        %v597 = vadd.f32 %v585, %v595
        %v598 = vshrl.u32 %v500, 16
        %v599 = vpack.i.b16 %v598, %v598
        %v601 = vlaneseq
        %v602 = vshrl.u32 %v601, 7
        %v603 = vsub.s32 2, %v602
        %v604 = vrot.slane %v599, %v603
        %v605 = vunpack.c.l.bf16 %v604
        %v606 = vmul.f32 %v605, %v296
        %v607 = vmul.f32 %v605, %v297
        %v608 = vadd.f32 %v596, %v606
        %v609 = vadd.f32 %v597, %v607
        %v610 = vshrl.u32 %v513, 16
        %v611 = vpack.i.b16 %v610, %v610
        %v613 = vlaneseq
        %v614 = vshrl.u32 %v613, 7
        %v615 = vsub.s32 1, %v614
        %v616 = vrot.slane %v611, %v615
        %v617 = vunpack.c.l.bf16 %v616
        %v618 = vmul.f32 %v617, %v313
        %v619 = vmul.f32 %v617, %v314
        %v620 = vadd.f32 %v608, %v618
        %v621 = vadd.f32 %v609, %v619
        %v622 = vshrl.u32 %v526, 16
        %v623 = vpack.i.b16 %v622, %v622
        %v625 = vlaneseq
        %v626 = vshrl.u32 %v625, 7
        %v627 = vsub.s32 0, %v626
        %v628 = vrot.slane %v623, %v627
        %v629 = vunpack.c.l.bf16 %v628
        %v630 = vmul.f32 %v629, %v330
        %v631 = vmul.f32 %v629, %v331
        %v632 = vadd.f32 %v620, %v630
        %v633 = vadd.f32 %v621, %v631
        %v634 = vmax.f32 %v632, 0.0
        %v635 = vmax.f32 %v633, 0.0
        %v636 = vshrl.u32 %v541, 16
        %v637 = vpack.i.b16 %v636, %v636
        %v639 = vlaneseq
        %v640 = vshrl.u32 %v639, 7
        %v641 = vsub.s32 2, %v640
        %v642 = vrot.slane %v637, %v641
        %v643 = vunpack.c.l.bf16 %v642
        %v644 = vmul.f32 %v634, %v643
        %v645 = vmul.f32 %v635, %v643
        %v646 = vadd.f32 %v552, %v644
        %v647 = vadd.f32 %v553, %v645
        %v648 = vld [vmem:[%s198 + $0x14] sm:$0x1]
        %v650 = vpack.i.b16 %v648, %v648
        %v652 = vlaneseq
        %v653 = vshrl.u32 %v652, 7
        %v654 = vsub.s32 0, %v653
        %v655 = vrot.slane %v650, %v654
        %v656 = vunpack.c.l.bf16 %v655
        %v657 = vld [vmem:[%s198] sm:$0x4]
        %v659 = vpack.i.b16 %v657, %v657
        %v661 = vlaneseq
        %v662 = vshrl.u32 %v661, 7
        %v663 = vsub.s32 2, %v662
        %v664 = vrot.slane %v659, %v663
        %v665 = vunpack.c.l.bf16 %v664
        %v666 = vmul.f32 %v665, %v245
        %v667 = vmul.f32 %v665, %v246
        %v668 = vadd.f32 %v656, %v666
        %v669 = vadd.f32 %v656, %v667
        %v670 = vld [vmem:[%s198 + $0x4] sm:$0x2]
        %v672 = vpack.i.b16 %v670, %v670
        %v674 = vlaneseq
        %v675 = vshrl.u32 %v674, 7
        %v676 = vsub.s32 1, %v675
        %v677 = vrot.slane %v672, %v676
        %v678 = vunpack.c.l.bf16 %v677
        %v679 = vmul.f32 %v678, %v262
        %v680 = vmul.f32 %v678, %v263
        %v681 = vadd.f32 %v668, %v679
        %v682 = vadd.f32 %v669, %v680
        %v683 = vld [vmem:[%s198 + $0x8] sm:$0x1]
        %v685 = vpack.i.b16 %v683, %v683
        %v687 = vlaneseq
        %v688 = vshrl.u32 %v687, 7
        %v689 = vsub.s32 0, %v688
        %v690 = vrot.slane %v685, %v689
        %v691 = vunpack.c.l.bf16 %v690
        %v692 = vmul.f32 %v691, %v279
        %v693 = vmul.f32 %v691, %v280
        %v694 = vadd.f32 %v681, %v692
        %v695 = vadd.f32 %v682, %v693
        %v696 = vld [vmem:[%s198 + $0x8] sm:$0x8]
        %v698 = vpack.i.b16 %v696, %v696
        %v700 = vlaneseq
        %v701 = vshrl.u32 %v700, 7
        %v702 = vsub.s32 3, %v701
        %v703 = vrot.slane %v698, %v702
        %v704 = vunpack.c.l.bf16 %v703
        %v705 = vmul.f32 %v704, %v296
        %v706 = vmul.f32 %v704, %v297
        %v707 = vadd.f32 %v694, %v705
        %v708 = vadd.f32 %v695, %v706
        %v709 = vld [vmem:[%s198 + $0xc] sm:$0x4]
        %v711 = vpack.i.b16 %v709, %v709
        %v713 = vlaneseq
        %v714 = vshrl.u32 %v713, 7
        %v715 = vsub.s32 2, %v714
        %v716 = vrot.slane %v711, %v715
        %v717 = vunpack.c.l.bf16 %v716
        %v718 = vmul.f32 %v717, %v313
        %v719 = vmul.f32 %v717, %v314
        %v720 = vadd.f32 %v707, %v718
        %v721 = vadd.f32 %v708, %v719
        %v722 = vld [vmem:[%s198 + $0x10] sm:$0x2]
        %v724 = vpack.i.b16 %v722, %v722
        %v726 = vlaneseq
        %v727 = vshrl.u32 %v726, 7
        %v728 = vsub.s32 1, %v727
        %v729 = vrot.slane %v724, %v728
        %v730 = vunpack.c.l.bf16 %v729
        %v731 = vmul.f32 %v730, %v330
        %v732 = vmul.f32 %v730, %v331
        %v733 = vadd.f32 %v720, %v731
        %v734 = vadd.f32 %v721, %v732
        %v735 = vmax.f32 %v733, 0.0
        %v736 = vmax.f32 %v734, 0.0
        %v737 = vld [vmem:[%s198 + $0x14] sm:$0x8]
        %v739 = vpack.i.b16 %v737, %v737
        %v741 = vlaneseq
        %v742 = vshrl.u32 %v741, 7
        %v743 = vsub.s32 3, %v742
        %v744 = vrot.slane %v739, %v743
        %v745 = vunpack.c.l.bf16 %v744
        %v746 = vmul.f32 %v735, %v745
        %v747 = vmul.f32 %v736, %v745
        %v748 = vadd.f32 %v646, %v746
        %v749 = vadd.f32 %v647, %v747
        %v750 = vshrl.u32 %v648, 16
        %v751 = vpack.i.b16 %v750, %v750
        %v753 = vlaneseq
        %v754 = vshrl.u32 %v753, 7
        %v755 = vsub.s32 0, %v754
        %v756 = vrot.slane %v751, %v755
        %v757 = vunpack.c.l.bf16 %v756
        %v758 = vshrl.u32 %v657, 16
        %v759 = vpack.i.b16 %v758, %v758
        %v761 = vlaneseq
        %v762 = vshrl.u32 %v761, 7
        %v763 = vsub.s32 2, %v762
        %v764 = vrot.slane %v759, %v763
        %v765 = vunpack.c.l.bf16 %v764
        %v766 = vmul.f32 %v765, %v245
        %v767 = vmul.f32 %v765, %v246
        %v768 = vadd.f32 %v757, %v766
        %v769 = vadd.f32 %v757, %v767
        %v770 = vshrl.u32 %v670, 16
        %v771 = vpack.i.b16 %v770, %v770
        %v773 = vlaneseq
        %v774 = vshrl.u32 %v773, 7
        %v775 = vsub.s32 1, %v774
        %v776 = vrot.slane %v771, %v775
        %v777 = vunpack.c.l.bf16 %v776
        %v778 = vmul.f32 %v777, %v262
        %v779 = vmul.f32 %v777, %v263
        %v780 = vadd.f32 %v768, %v778
        %v781 = vadd.f32 %v769, %v779
        %v782 = vshrl.u32 %v683, 16
        %v783 = vpack.i.b16 %v782, %v782
        %v785 = vlaneseq
        %v786 = vshrl.u32 %v785, 7
        %v787 = vsub.s32 0, %v786
        %v788 = vrot.slane %v783, %v787
        %v789 = vunpack.c.l.bf16 %v788
        %v790 = vmul.f32 %v789, %v279
        %v791 = vmul.f32 %v789, %v280
        %v792 = vadd.f32 %v780, %v790
        %v793 = vadd.f32 %v781, %v791
        %v794 = vshrl.u32 %v696, 16
        %v795 = vpack.i.b16 %v794, %v794
        %v797 = vlaneseq
        %v798 = vshrl.u32 %v797, 7
        %v799 = vsub.s32 3, %v798
        %v800 = vrot.slane %v795, %v799
        %v801 = vunpack.c.l.bf16 %v800
        %v802 = vmul.f32 %v801, %v296
        %v803 = vmul.f32 %v801, %v297
        %v804 = vadd.f32 %v792, %v802
        %v805 = vadd.f32 %v793, %v803
        %v806 = vshrl.u32 %v709, 16
        %v807 = vpack.i.b16 %v806, %v806
        %v809 = vlaneseq
        %v810 = vshrl.u32 %v809, 7
        %v811 = vsub.s32 2, %v810
        %v812 = vrot.slane %v807, %v811
        %v813 = vunpack.c.l.bf16 %v812
        %v814 = vmul.f32 %v813, %v313
        %v815 = vmul.f32 %v813, %v314
        %v816 = vadd.f32 %v804, %v814
        %v817 = vadd.f32 %v805, %v815
        %v818 = vshrl.u32 %v722, 16
        %v819 = vpack.i.b16 %v818, %v818
        %v821 = vlaneseq
        %v822 = vshrl.u32 %v821, 7
        %v823 = vsub.s32 1, %v822
        %v824 = vrot.slane %v819, %v823
        %v825 = vunpack.c.l.bf16 %v824
        %v826 = vmul.f32 %v825, %v330
        %v827 = vmul.f32 %v825, %v331
        %v828 = vadd.f32 %v816, %v826
        %v829 = vadd.f32 %v817, %v827
        %v830 = vmax.f32 %v828, 0.0
        %v831 = vmax.f32 %v829, 0.0
        %v832 = vshrl.u32 %v737, 16
        %v833 = vpack.i.b16 %v832, %v832
        %v835 = vlaneseq
        %v836 = vshrl.u32 %v835, 7
        %v837 = vsub.s32 3, %v836
        %v838 = vrot.slane %v833, %v837
        %v839 = vunpack.c.l.bf16 %v838
        %v840 = vmul.f32 %v830, %v839
        %v841 = vmul.f32 %v831, %v839
        %v842 = vadd.f32 %v748, %v840
        %v843 = vadd.f32 %v749, %v841
        %v844 = vld [vmem:[#allocation2] sm:$0xff]
        %v845 = vld [vmem:[#allocation2 + $0x8] sm:$0xff]
        %v846 = vadd.f32 %v844, %v842
        %v847 = vadd.f32 %v845, %v843
        %848 = vst [vmem:[#allocation2] sm:$0xff] %v846
        %849 = vst [vmem:[#allocation2 + $0x8] sm:$0xff] %v847
        %p850 = scmp.eq.s32.totalorder %s27, 1
        // Predicated region
        $region41: #{tpu_custom_call.1} parent=27 // pred_check
          %p851 = pneg %p850
        $region42: #{tpu_custom_call.1} parent=27 // pred_check_branch
          %853 = sbr.rel (%p851) target = $region44
        $region43: #{tpu_custom_call.1} parent=27 // pred_region
          %v854 = vld [vmem:[#allocation2] sm:$0xff]
          %v855 = vld [vmem:[#allocation2 + $0x8] sm:$0xff]
          %856 = vadd.xlane.f32.xlu0 %v854
          %v857 = vpop.xlane.xlu0 %856
          %858 = vadd.xlane.f32.xlu0 %v855
          %v859 = vpop.xlane.xlu0 %858
          %860 = vst [vmem:[%s223] sm:$0xff] %v857
          %861 = vst [vmem:[%s223 + $0x8] sm:$0xff] %v859
        $region44: #{tpu_custom_call.1} parent=27 // pred_fallthru
          _
        %s862 = sand.u32 %s102, 1
        %s863 = scalar_lea.sflag [#allocation5], %s862
        %s864 = sand.u32 %s102, 1
        %s865 = smul.addr %s864, 16
        %s866 = scalar_lea.vmem [#allocation8], %s865
        // Predicated region
        $region45: #{tpu_custom_call.1} parent=27 // pred_check
          %p867 = pneg %p112
        $region46: #{tpu_custom_call.1} parent=27 // pred_check_branch
          %869 = sbr.rel (%p867) target = $region48
        $region47: #{tpu_custom_call.1} parent=27 // pred_region
          %s871 = ssub.s32 256, 256
          %872 = vsyncadd %s863, %s871
          %s873 = smul.addr %s26, 2
          %s874 = smul.addr %s873, 128
          %s875 = scalar_lea.hbm %s2, %s874
          %s876 = sshll.u32 %s866, 4
          %s877 = int_to_ptr.vmem [resolvable:$true] %s876
          %882 = dma.vmem_to_hbm [thread:$0]  %s877, 256, %s875, %s863, 128, 128, 8
        $region48: #{tpu_custom_call.1} parent=27 // pred_fallthru
          _
      $region28: #{tpu_custom_call.1} parent=5 // pred_fallthru
        _
      %p883 = scmp.le.s32.totalorder 2, %s17
      // Predicated region
      $region49: #{tpu_custom_call.1} parent=5 // pred_check
        %p884 = pneg %p883
      $region50: #{tpu_custom_call.1} parent=5 // pred_check_branch
        %886 = sbr.rel (%p884) target = $region52
      $region51: #{tpu_custom_call.1} parent=5 // pred_region
        %s887 = ssub.s32 %s17, 2
        // Predicated region
        $region53: #{tpu_custom_call.1} parent=51 // pred_check
          %p888 = pneg %p118
        $region54: #{tpu_custom_call.1} parent=51 // pred_check_branch
          %890 = sbr.rel (%p888) target = $region56
        $region55: #{tpu_custom_call.1} parent=51 // pred_region
          %s891 = sand.u32 %s103, 1
          %s892 = scalar_lea.sflag [#allocation5], %s891
          %s893 = sand.u32 %s103, 1
          %s894 = smul.addr %s893, 16
          %s895 = scalar_lea.vmem [#allocation8], %s894
          %896 = dma.done %s892, 256
        $region56: #{tpu_custom_call.1} parent=51 // pred_fallthru
          _
      $region52: #{tpu_custom_call.1} parent=5 // pred_fallthru
        _
    $region6: #{tpu_custom_call.1} parent=1 // loop_footer
      %s21 = sadd.s32 1, %s17
    $region7: #{tpu_custom_call.1} parent=1 // loop_footer_branch
      %16 = sbr.rel target = $region3
    $region8: #{tpu_custom_call.1} parent=1 // loop_exit
      _
    %897 = vsyncpa [#allocation4], 1
    %s898 = scalar_lea.sflag [#allocation4], 1
    %899 = vsyncpa %s898, 1
    %900 = vsyncpa [#allocation7], 1
    %s901 = scalar_lea.sflag [#allocation7], 1
    %902 = vsyncpa %s901, 1
    %903 = vsyncpa [#allocation5], 1
    %s904 = scalar_lea.sflag [#allocation5], 1
    %905 = vsyncpa %s904, 1

</llo_original>
